<compile_context>
chip_gen: v7x
topology: tpu7x:2x2x1
jax: 0.10.0
libtpu: 0.0.40
codegen_flags: <defaults>
</compile_context>

<pallas_src>
import functools

import jax
import jax.numpy as jnp
from jax.experimental import pallas as pl
from jax.experimental.pallas import tpu as pltpu


def _round_up(x, m):
    return ((x + m - 1) // m) * m


# ---------------------------------------------------------------------------
# Pass 1: patches -> encoder matmul -> L2 normalize -> Linear1 ; accumulate z1 stats
# ---------------------------------------------------------------------------
def encode_z1_kernel(patch_ref, we_ref, w1_ref, z1_ref, stats1_ref):
    # patch_ref:  (TILE_N, Pp)  bf16   per-tile
    # we_ref:     (Pp, Fp)      bf16   resident (encoder conv weight, pre-transposed)
    # w1_ref:     (Fp, Fp)      bf16   resident (projector Linear1, pre-transposed)
    # z1_ref:     (TILE_N, Fp)  f32    per-tile output (pre-BN activations)
    # stats1_ref: (2, Fp)       f32    accumulator: row0 = sum, row1 = sum of squares
    i = pl.program_id(0)

    @pl.when(i == 0)
    def _():
        stats1_ref[...] = jnp.zeros_like(stats1_ref)

    # encoder: conv(anchor, stride=anchor) == patch matmul (bf16 MXU, f32 accumulate)
    h = jnp.dot(patch_ref[...], we_ref[...], preferred_element_type=jnp.float32)

    # F.normalize(h, dim=1): h / max(||h||, 1e-12)  ==  h * rsqrt(max(||h||^2, 1e-24))
    ss = jnp.sum(h * h, axis=1, keepdims=True)
    h = h * jax.lax.rsqrt(jnp.maximum(ss, 1e-24))

    # projector Linear(F, F, bias=False)
    z1 = jnp.dot(h.astype(jnp.bfloat16), w1_ref[...],
                 preferred_element_type=jnp.float32)
    z1_ref[...] = z1

    # Accumulate batch statistics.  Zero-padded patch rows yield z1 == 0 exactly
    # (zero patch -> h = 0 -> normalized h = 0 -> z1 = 0), so no row mask is needed here.
    s = jnp.sum(z1, axis=0, keepdims=True)
    sq = jnp.sum(z1 * z1, axis=0, keepdims=True)
    stats1_ref[...] += jnp.concatenate([s, sq], axis=0)


# ---------------------------------------------------------------------------
# Pass 2: BN1 (batch stats) + ReLU -> Linear2 ; accumulate z2 stats
# ---------------------------------------------------------------------------
def bn1_relu_z2_kernel(z1_ref, stats1_ref, g1_ref, b1_ref, w2_ref,
                       z2_ref, stats2_ref, *, n_rows, tile_n):
    # z1_ref:     (TILE_N, Fp) f32    per-tile
    # stats1_ref: (2, Fp)      f32    resident (sum / sumsq of z1 over the full batch)
    # g1/b1:      (1, Fp)      f32    BatchNorm1d(F) affine
    # w2_ref:     (Fp, Dp)     bf16   resident (projector Linear2, pre-transposed)
    # z2_ref:     (TILE_N, Dp) f32    per-tile output (pre-BN activations)
    # stats2_ref: (2, Dp)      f32    accumulator: row0 = sum, row1 = sum of squares
    i = pl.program_id(0)

    @pl.when(i == 0)
    def _():
        stats2_ref[...] = jnp.zeros_like(stats2_ref)

    inv_n = 1.0 / n_rows
    st1 = stats1_ref[...]
    m1 = st1[0:1, :] * inv_n
    v1 = jnp.maximum(st1[1:2, :] * inv_n - m1 * m1, 0.0)   # biased variance (train mode)

    a = (z1_ref[...] - m1) * jax.lax.rsqrt(v1 + 1e-5) * g1_ref[...] + b1_ref[...]
    a = jnp.maximum(a, 0.0)                                 # ReLU

    # Mask padded rows (global row >= n_rows) to zero so they contribute nothing to the
    # z2 batch statistics (BN1's beta makes them nonzero otherwise).
    row = jax.lax.broadcasted_iota(jnp.int32, a.shape, 0) + i * tile_n
    a = jnp.where(row < n_rows, a, 0.0)

    # projector Linear(F, D, bias=False)
    z2 = jnp.dot(a.astype(jnp.bfloat16), w2_ref[...],
                 preferred_element_type=jnp.float32)
    z2_ref[...] = z2

    s = jnp.sum(z2, axis=0, keepdims=True)
    sq = jnp.sum(z2 * z2, axis=0, keepdims=True)
    stats2_ref[...] += jnp.concatenate([s, sq], axis=0)


# ---------------------------------------------------------------------------
# Pass 3: BN2 (batch stats) -> output
# ---------------------------------------------------------------------------
def bn2_kernel(z2_ref, stats2_ref, g2_ref, b2_ref, out_ref, *, n_rows):
    inv_n = 1.0 / n_rows
    st2 = stats2_ref[...]
    m2 = st2[0:1, :] * inv_n
    v2 = jnp.maximum(st2[1:2, :] * inv_n - m2 * m2, 0.0)
    out_ref[...] = ((z2_ref[...] - m2) * jax.lax.rsqrt(v2 + 1e-5)
                    * g2_ref[...] + b2_ref[...])


# ---------------------------------------------------------------------------
# Wrapper
# ---------------------------------------------------------------------------
def contrique_forward(x, params, *, anchor_size, n_features, projection_dim,
                      tile_n=256):
    """x: (b, c, t, h, w) float32.  Returns z: (b, t, num_grid, projection_dim) f32."""
    b, c, t, H, W = x.shape
    A = anchor_size
    gh, gw = H // A, W // A
    num_grid = gh * gw
    N = b * t * num_grid
    P = c * A * A
    F_ = n_features
    D = projection_dim

    we, w1, g1, b1, w2, g2, b2 = params  # we:(P,F)  w1:(F,F)  w2:(F,D)  pre-transposed

    # rearrange 'b c t h w -> (b t) c h w', then anchor-grid patchify:
    # view(bt, c, H//A, A, W//A, A).permute(0,2,4,1,3,5).view(N, c, A, A) -> flatten.
    # TODO(synk): could be folded into the kernel index_map to avoid one extra HBM
    # round-trip of the input; kept as host-side XLA plumbing for clarity.
    xt = jnp.transpose(x, (0, 2, 1, 3, 4)).reshape(b * t, c, H, W)
    patches = (xt.reshape(b * t, c, gh, A, gw, A)
                 .transpose(0, 2, 4, 1, 3, 5)
                 .reshape(N, P))

    # --- pad to TPU-friendly shapes: lanes -> multiples of 128, rows -> tile multiple ---
    Pp = _round_up(P, 128)
    Fp = _round_up(F_, 128)
    Dp = _round_up(D, 128)
    # tile_n is the per-generation knob: ~512-1024 fits v7x's 64 MiB VMEM at F=2048,
    # 1024-2048 fits v5e/v6e's 128 MiB.  Must be a multiple of 8.
    tile_n = min(tile_n, _round_up(N, 8))
    Np = _round_up(N, tile_n)
    num_tiles = Np // tile_n

    patches_p = jnp.pad(patches, ((0, Np - N), (0, Pp - P))).astype(jnp.bfloat16)
    we_p = jnp.pad(we, ((0, Pp - P), (0, Fp - F_))).astype(jnp.bfloat16)
    w1_p = jnp.pad(w1, ((0, Fp - F_), (0, Fp - F_))).astype(jnp.bfloat16)
    w2_p = jnp.pad(w2, ((0, Fp - F_), (0, Dp - D))).astype(jnp.bfloat16)
    g1_p = jnp.pad(g1, ((0, 0), (0, Fp - F_)), constant_values=1.0)
    b1_p = jnp.pad(b1, ((0, 0), (0, Fp - F_)))
    g2_p = jnp.pad(g2, ((0, 0), (0, Dp - D)), constant_values=1.0)
    b2_p = jnp.pad(b2, ((0, 0), (0, Dp - D)))

    # --- pass 1: encoder matmul + L2 normalize + Linear1 ; z1 batch stats -------------
    z1, stats1 = pl.pallas_call(
        encode_z1_kernel,
        out_shape=(jax.ShapeDtypeStruct((Np, Fp), jnp.float32),
                   jax.ShapeDtypeStruct((2, Fp), jnp.float32)),
        grid=(num_tiles,),
        in_specs=[
            pl.BlockSpec((tile_n, Pp), lambda i: (i, 0)),   # patches tile (pipelined)
            pl.BlockSpec((Pp, Fp), lambda i: (0, 0)),        # encoder weight (resident)
            pl.BlockSpec((Fp, Fp), lambda i: (0, 0)),        # Linear1 weight (resident)
        ],
        out_specs=(
            pl.BlockSpec((tile_n, Fp), lambda i: (i, 0)),    # z1 tile
            pl.BlockSpec((2, Fp), lambda i: (0, 0)),         # stats accumulator
        ),
        compiler_params=pltpu.CompilerParams(
            dimension_semantics=("arbitrary",)),             # accumulator axis
    )(patches_p, we_p, w1_p)

    # --- pass 2: BN1 + ReLU + Linear2 ; z2 batch stats ---------------------------------
    z2, stats2 = pl.pallas_call(
        functools.partial(bn1_relu_z2_kernel, n_rows=N, tile_n=tile_n),
        out_shape=(jax.ShapeDtypeStruct((Np, Dp), jnp.float32),
                   jax.ShapeDtypeStruct((2, Dp), jnp.float32)),
        grid=(num_tiles,),
        in_specs=[
            pl.BlockSpec((tile_n, Fp), lambda i: (i, 0)),    # z1 tile
            pl.BlockSpec((2, Fp), lambda i: (0, 0)),         # z1 stats (resident)
            pl.BlockSpec((1, Fp), lambda i: (0, 0)),         # gamma1
            pl.BlockSpec((1, Fp), lambda i: (0, 0)),         # beta1
            pl.BlockSpec((Fp, Dp), lambda i: (0, 0)),        # Linear2 weight (resident)
        ],
        out_specs=(
            pl.BlockSpec((tile_n, Dp), lambda i: (i, 0)),    # z2 tile
            pl.BlockSpec((2, Dp), lambda i: (0, 0)),         # stats accumulator
        ),
        compiler_params=pltpu.CompilerParams(
            dimension_semantics=("arbitrary",)),
    )(z1, stats1, g1_p, b1_p, w2_p)

    # --- pass 3: BN2 (elementwise apply) ------------------------------------------------
    out = pl.pallas_call(
        functools.partial(bn2_kernel, n_rows=N),
        out_shape=jax.ShapeDtypeStruct((Np, Dp), jnp.float32),
        grid=(num_tiles,),
        in_specs=[
            pl.BlockSpec((tile_n, Dp), lambda i: (i, 0)),    # z2 tile
            pl.BlockSpec((2, Dp), lambda i: (0, 0)),         # z2 stats (resident)
            pl.BlockSpec((1, Dp), lambda i: (0, 0)),         # gamma2
            pl.BlockSpec((1, Dp), lambda i: (0, 0)),         # beta2
        ],
        out_specs=pl.BlockSpec((tile_n, Dp), lambda i: (i, 0)),
        compiler_params=pltpu.CompilerParams(
            dimension_semantics=("parallel",)),              # independent rows -> 2nd TC on v7x
    )(z2, stats2, g2_p, b2_p)

    return out[:N, :D].reshape(b, t, num_grid, D)


def init_params(key, c, anchor_size, n_features, projection_dim):
    P = c * anchor_size * anchor_size
    k0, k1, k2, k3, k4, k5, k6 = jax.random.split(key, 7)
    # Weights stored pre-transposed as (in, out) (== torch Linear weight .T) so the
    # kernels contract activation-last-dim vs weight-first-dim with no in-kernel .T.
    we = jax.random.normal(k0, (P, n_features), jnp.float32) / jnp.sqrt(P)
    w1 = jax.random.normal(k1, (n_features, n_features), jnp.float32) / jnp.sqrt(n_features)
    g1 = 1.0 + 0.1 * jax.random.normal(k2, (1, n_features), jnp.float32)
    b1 = 0.1 * jax.random.normal(k3, (1, n_features), jnp.float32)
    w2 = jax.random.normal(k4, (n_features, projection_dim), jnp.float32) / jnp.sqrt(n_features)
    g2 = 1.0 + 0.1 * jax.random.normal(k5, (1, projection_dim), jnp.float32)
    b2 = 0.1 * jax.random.normal(k6, (1, projection_dim), jnp.float32)
    return (we, w1, g1, b1, w2, g2, b2)


if __name__ == "__main__":
    # Small shapes consistent with the forward pass:
    # b=2, c=3, t=3, h=w=64, anchor=16 -> num_grid=16, N=96 patches (2 row-tiles of 64,
    # with 32 padded+masked rows), P=768, F=256, D=96 (padded to 128 lanes).
    b, c, t, H, W = 2, 3, 3, 64, 64
    anchor_size = 16
    n_features = 256
    projection_dim = 96

    key = jax.random.PRNGKey(0)
    kx, kp = jax.random.split(key)
    x = jax.random.normal(kx, (b, c, t, H, W), jnp.float32)
    params = init_params(kp, c, anchor_size, n_features, projection_dim)

    z = contrique_forward(x, params,
                          anchor_size=anchor_size,
                          n_features=n_features,
                          projection_dim=projection_dim,
                          tile_n=64)
    jax.block_until_ready(z)

    num_grid = (H // anchor_size) * (W // anchor_size)
    assert z.shape == (b, t, num_grid, projection_dim), z.shape
    assert bool(jnp.all(jnp.isfinite(z)))
    print("KERNEL_OK")
</pallas_src>

<mosaic_0001>
module attributes {stable_mosaic.version = 11 : i64} {
  func.func @encode_z1_kernel(%arg0: i32, %arg1: memref<64x768xbf16, #tpu.memory_space<vmem>>, %arg2: memref<768x256xbf16, #tpu.memory_space<vmem>>, %arg3: memref<256x256xbf16, #tpu.memory_space<vmem>>, %arg4: memref<64x256xf32, #tpu.memory_space<vmem>>, %arg5: memref<2x256xf32, #tpu.memory_space<vmem>>) attributes {dimension_semantics = [#tpu.dimension_semantics<arbitrary>], iteration_bounds = array<i64: 2>, scalar_prefetch = 0 : i64, scratch_operands = 0 : i64, tpu.core_type = #tpu.core_type<tc>, window_params = [{transform_indices = @transform_0, window_bounds = array<i64: 64, 768>}, {pipeline_mode = #tpu.pipeline_mode<synchronous>, transform_indices = @transform_1, window_bounds = array<i64: 768, 256>}, {pipeline_mode = #tpu.pipeline_mode<synchronous>, transform_indices = @transform_2, window_bounds = array<i64: 256, 256>}, {transform_indices = @transform_3, window_bounds = array<i64: 64, 256>}, {pipeline_mode = #tpu.pipeline_mode<synchronous>, transform_indices = @transform_4, window_bounds = array<i64: 2, 256>}]} {
    %c0_i32 = arith.constant 0 : i32
    %0 = arith.cmpi eq, %arg0, %c0_i32 : i32
    %1 = arith.extui %0 : i1 to i32
    %c0_i32_0 = arith.constant 0 : i32
    %2 = arith.cmpi ne, %1, %c0_i32_0 : i32
    scf.if %2 {
      %cst_17 = arith.constant 0.000000e+00 : f32
      %27 = vector.broadcast %cst_17 : f32 to vector<2x256xf32>
      %c0_18 = arith.constant 0 : index
      %c0_19 = arith.constant 0 : index
      %28 = vector.load %arg5[%c0_18, %c0_19] : memref<2x256xf32, #tpu.memory_space<vmem>>, vector<2x256xf32>
      tpu.vector_store %arg5[%c0_18, %c0_19], %27 {strides = array<i32>} : memref<2x256xf32, #tpu.memory_space<vmem>>, vector<2x256xf32>,
    } else {
    }
    %c0 = arith.constant 0 : index
    %c0_1 = arith.constant 0 : index
    %3 = vector.load %arg1[%c0, %c0_1] : memref<64x768xbf16, #tpu.memory_space<vmem>>, vector<64x768xbf16>
    %c0_2 = arith.constant 0 : index
    %c0_3 = arith.constant 0 : index
    %4 = vector.load %arg2[%c0_2, %c0_3] : memref<768x256xbf16, #tpu.memory_space<vmem>>, vector<768x256xbf16>
    %cst = arith.constant dense<0.000000e+00> : vector<64x256xf32>
    %5 = tpu.matmul %3, %4, %cst {dimension_numbers = #tpu.dot_dimension_numbers<[1], [0], [0], [1], [0, 0, 1, 1], [], []>} : vector<64x768xbf16>, vector<768x256xbf16>, vector<64x256xf32> -> vector<64x256xf32>
    %6 = arith.mulf %5, %5 : vector<64x256xf32>
    %cst_4 = arith.constant dense<0.000000e+00> : vector<64xf32>
    %7 = vector.multi_reduction <add>, %6, %cst_4 [1] : vector<64x256xf32> to vector<64xf32>
    %8 = vector.shape_cast %7 : vector<64xf32> to vector<64x1xf32>
    %cst_5 = arith.constant 1.000000e-24 : f32
    %9 = vector.broadcast %cst_5 : f32 to vector<64x1xf32>
    %10 = arith.maximumf %8, %9 : vector<64x1xf32>
    %11 = math.rsqrt %10 : vector<64x1xf32>
    %12 = vector.broadcast %11 : vector<64x1xf32> to vector<64x256xf32>
    %13 = arith.mulf %5, %12 : vector<64x256xf32>
    %14 = arith.truncf %13 : vector<64x256xf32> to vector<64x256xbf16>
    %c0_6 = arith.constant 0 : index
    %c0_7 = arith.constant 0 : index
    %15 = vector.load %arg3[%c0_6, %c0_7] : memref<256x256xbf16, #tpu.memory_space<vmem>>, vector<256x256xbf16>
    %cst_8 = arith.constant dense<0.000000e+00> : vector<64x256xf32>
    %16 = tpu.matmul %14, %15, %cst_8 {dimension_numbers = #tpu.dot_dimension_numbers<[1], [0], [0], [1], [0, 0, 1, 1], [], []>} : vector<64x256xbf16>, vector<256x256xbf16>, vector<64x256xf32> -> vector<64x256xf32>
    %c0_9 = arith.constant 0 : index
    %c0_10 = arith.constant 0 : index
    %17 = vector.load %arg4[%c0_9, %c0_10] : memref<64x256xf32, #tpu.memory_space<vmem>>, vector<64x256xf32>
    tpu.vector_store %arg4[%c0_9, %c0_10], %16 {strides = array<i32>} : memref<64x256xf32, #tpu.memory_space<vmem>>, vector<64x256xf32>,
    %cst_11 = arith.constant dense<0.000000e+00> : vector<256xf32>
    %18 = vector.multi_reduction <add>, %16, %cst_11 [0] : vector<64x256xf32> to vector<256xf32>
    %19 = vector.shape_cast %18 : vector<256xf32> to vector<1x256xf32>
    %20 = arith.mulf %16, %16 : vector<64x256xf32>
    %cst_12 = arith.constant dense<0.000000e+00> : vector<256xf32>
    %21 = vector.multi_reduction <add>, %20, %cst_12 [0] : vector<64x256xf32> to vector<256xf32>
    %22 = vector.shape_cast %21 : vector<256xf32> to vector<1x256xf32>
    %c0_13 = arith.constant 0 : index
    %c0_14 = arith.constant 0 : index
    %23 = vector.load %arg5[%c0_13, %c0_14] : memref<2x256xf32, #tpu.memory_space<vmem>>, vector<2x256xf32>
    %24 = tpu.concatenate %19, %22 in 0 : vector<1x256xf32>, vector<1x256xf32> -> vector<2x256xf32>
    %25 = arith.addf %23, %24 : vector<2x256xf32>
    %c0_15 = arith.constant 0 : index
    %c0_16 = arith.constant 0 : index
    %26 = vector.load %arg5[%c0_15, %c0_16] : memref<2x256xf32, #tpu.memory_space<vmem>>, vector<2x256xf32>
    tpu.vector_store %arg5[%c0_15, %c0_16], %25 {strides = array<i32>} : memref<2x256xf32, #tpu.memory_space<vmem>>, vector<2x256xf32>,
    return
  }
  func.func @transform_0(%arg0: i32) -> (i32, i32) {
    %c0_i32 = arith.constant 0 : i32
    %c0_i32_0 = arith.constant 0 : i32
    return %arg0, %c0_i32 : i32, i32
  }
  func.func @transform_1(%arg0: i32) -> (i32, i32) {
    %c0_i32 = arith.constant 0 : i32
    %c0_i32_0 = arith.constant 0 : i32
    %c0_i32_1 = arith.constant 0 : i32
    return %c0_i32, %c0_i32_0 : i32, i32
  }
  func.func @transform_2(%arg0: i32) -> (i32, i32) {
    %c0_i32 = arith.constant 0 : i32
    %c0_i32_0 = arith.constant 0 : i32
    %c0_i32_1 = arith.constant 0 : i32
    return %c0_i32, %c0_i32_0 : i32, i32
  }
  func.func @transform_3(%arg0: i32) -> (i32, i32) {
    %c0_i32 = arith.constant 0 : i32
    %c0_i32_0 = arith.constant 0 : i32
    return %arg0, %c0_i32 : i32, i32
  }
  func.func @transform_4(%arg0: i32) -> (i32, i32) {
    %c0_i32 = arith.constant 0 : i32
    %c0_i32_0 = arith.constant 0 : i32
    %c0_i32_1 = arith.constant 0 : i32
    return %c0_i32, %c0_i32_0 : i32, i32
  }
}

</mosaic_0001>

<llo_original>
// kernel: tpu_custom_call.1
$region0: #{tpu_custom_call.1}
  #allocation0 [shape = 'u32[]', space=smem, size = 0x4, offset = 0x4, fixed_abs, tag = 'smem constant byte address 0x4 - core index']
  #allocation1 [shape = 'u32[144,128]{1,0:T(1,128)}', space=vmem, size = 0x12000, scoped, tag = 'internal scratch']
  %s0 = inlined_call_operand.hbm [shape: bf16[128,768], index: 0, kind: input, shape index: {}]
  %s1 = inlined_call_operand.hbm [shape: bf16[768,256], index: 1, kind: input, shape index: {}]
  %s2 = inlined_call_operand.hbm [shape: bf16[256,256], index: 2, kind: input, shape index: {}]
  %s3 = inlined_call_operand.hbm [shape: f32[128,256], index: 3, kind: output, shape index: {0}]
  %s4 = inlined_call_operand.hbm [shape: f32[2,256], index: 4, kind: output, shape index: {1}]
  %5 = xla_tuple %s3, %s4
  %s6 = sld [smem:[#allocation0]]
  $region69: #{tpu_custom_call.1} parent=0
    _
  %s8 = ssub.s32 1, %s6
  %s9 = scalar_select 0, %s8, %s6
  $region1: #{tpu_custom_call.1} parent=0
    #allocation2 [shape = 'u8[196608]{0}', space=vmem, size = 0x30000, scoped, tag = 'input window, operand 0']
    #allocation3 [shape = 's32[2]{0}', space=sflag, size = 0x8, scoped, tag = 'scoped memory for tpu_custom_call.1']
    #allocation4 [shape = 's32[2]{0}', space=sflag, size = 0x8, scoped, tag = 'scoped memory for tpu_custom_call.1']
    #allocation5 [shape = 'u8[393216]{0}', space=vmem, size = 0x60000, scoped, tag = 'input window, operand 1, single buffered']
    #allocation6 [shape = 's32[1]{0}', space=sflag, size = 0x4, scoped, tag = 'scoped memory for tpu_custom_call.1']
    #allocation7 [shape = 'u8[131072]{0}', space=vmem, size = 0x20000, scoped, tag = 'input window, operand 2, single buffered']
    #allocation8 [shape = 'u8[131072]{0}', space=vmem, size = 0x20000, scoped, tag = 'output window, operand 0']
    #allocation9 [shape = 'u8[2048]{0}', space=vmem, size = 0x800, scoped, tag = 'output window, operand 1, single buffered']
    #allocation10 [shape = 's32[1]{0}', space=sflag, size = 0x4, scoped, tag = 'scoped memory for tpu_custom_call.1']
    %10 = vsyncpa [#allocation3], 0
    %s11 = scalar_lea.sflag [#allocation3], 1
    %12 = vsyncpa %s11, 0
    %13 = vsyncpa [#allocation6], 0
    %14 = vsyncpa [#allocation4], 0
    %s15 = scalar_lea.sflag [#allocation4], 1
    %16 = vsyncpa %s15, 0
    %17 = vsyncpa [#allocation10], 0
    loop: start=0, step=1, limit=4
    $region2: #{tpu_custom_call.1} parent=1 // loop_pre_header
      _
    $region3: #{tpu_custom_call.1} parent=1 // loop_header
      %s19 = sphi 0, %s23
      %p20 = scmp.ge.s32.totalorder %s19, 4
      %s29 = sphi 0, %s31
      %s32 = sphi 0, %s29
      %s33 = sphi 0, %s32
      %s49 = sphi 0, %s33
      %s53 = sphi 0, %s53
      %s55 = sphi 0, %s53
      %s56 = sphi 0, %s55
      %s70 = sphi 0, %s56
      %s74 = sphi 0, %s74
      %s76 = sphi 0, %s74
      %s77 = sphi 0, %s76
      %s91 = sphi 0, %s77
      %s97 = sphi 0, %s99
      %s100 = sphi 0, %s97
      %s101 = sphi 0, %s100
      %s117 = sphi 0, %s101
      %s121 = sphi 0, %s121
      %s123 = sphi 0, %s121
      %s124 = sphi 0, %s123
      %s138 = sphi 0, %s124
    $region4: #{tpu_custom_call.1} parent=1 // loop_header_branch
      %22 = sbr.rel (%p20) target = $region8
    $region5: #{tpu_custom_call.1} parent=1 // loop_body
      %s24 = ssub.s32 %s19, 1
      %s25 = ssub.s32 %s19, 2
      %s26 = sadd.s32 %s19, 1
      %s27 = ssub.s32 %s19, %s26
      %p28 = scmp.eq.s32.totalorder %s27, 0
      %s30 = sadd.s32 %s29, 1
      %s31 = scalar_select %p28, %s29, %s30
      %p34 = pneg %p28
      %p35 = scmp.eq.s32.totalorder %s19, 1
      %p36 = por %p34, %p35
      %p37 = scmp.ne.s32.totalorder %s29, %s32
      %p38 = scmp.eq.s32.totalorder %s19, 0
      %p39 = por %p37, %p38
      %p40 = scmp.ne.s32.totalorder %s29, %s32
      %p41 = scmp.eq.s32.totalorder %s24, 1
      %p42 = por %p40, %p41
      %p43 = scmp.ne.s32.totalorder %s32, %s33
      %p44 = scmp.eq.s32.totalorder %s24, 0
      %p45 = por %p43, %p44
      %p46 = scmp.ne.s32.totalorder %s32, %s33
      %p47 = scmp.eq.s32.totalorder %s25, 1
      %p48 = por %p46, %p47
      %p50 = scmp.ne.s32.totalorder %s33, %s49
      %p51 = scmp.eq.s32.totalorder %s25, 0
      %p52 = por %p50, %p51
      %s54 = sadd.s32 %s53, 1
      %p57 = scmp.eq.s32.totalorder %s19, 1
      %p58 = scmp.ne.s32.totalorder %s53, %s55
      %p59 = scmp.eq.s32.totalorder %s19, 0
      %p60 = por %p58, %p59
      %p61 = scmp.ne.s32.totalorder %s53, %s55
      %p62 = scmp.eq.s32.totalorder %s24, 1
      %p63 = por %p61, %p62
      %p64 = scmp.ne.s32.totalorder %s55, %s56
      %p65 = scmp.eq.s32.totalorder %s24, 0
      %p66 = por %p64, %p65
      %p67 = scmp.ne.s32.totalorder %s55, %s56
      %p68 = scmp.eq.s32.totalorder %s25, 1
      %p69 = por %p67, %p68
      %p71 = scmp.ne.s32.totalorder %s56, %s70
      %p72 = scmp.eq.s32.totalorder %s25, 0
      %p73 = por %p71, %p72
      %s75 = sadd.s32 %s74, 1
      %p78 = scmp.eq.s32.totalorder %s19, 1
      %p79 = scmp.ne.s32.totalorder %s74, %s76
      %p80 = scmp.eq.s32.totalorder %s19, 0
      %p81 = por %p79, %p80
      %p82 = scmp.ne.s32.totalorder %s74, %s76
      %p83 = scmp.eq.s32.totalorder %s24, 1
      %p84 = por %p82, %p83
      %p85 = scmp.ne.s32.totalorder %s76, %s77
      %p86 = scmp.eq.s32.totalorder %s24, 0
      %p87 = por %p85, %p86
      %p88 = scmp.ne.s32.totalorder %s76, %s77
      %p89 = scmp.eq.s32.totalorder %s25, 1
      %p90 = por %p88, %p89
      %p92 = scmp.ne.s32.totalorder %s77, %s91
      %p93 = scmp.eq.s32.totalorder %s25, 0
      %p94 = por %p92, %p93
      %s95 = ssub.s32 %s19, %s26
      %p96 = scmp.eq.s32.totalorder %s95, 0
      %s98 = sadd.s32 %s97, 1
      %s99 = scalar_select %p96, %s97, %s98
      %p102 = pneg %p96
      %p103 = scmp.eq.s32.totalorder %s19, 1
      %p104 = por %p102, %p103
      %p105 = scmp.ne.s32.totalorder %s97, %s100
      %p106 = scmp.eq.s32.totalorder %s19, 0
      %p107 = por %p105, %p106
      %p108 = scmp.ne.s32.totalorder %s97, %s100
      %p109 = scmp.eq.s32.totalorder %s24, 1
      %p110 = por %p108, %p109
      %p111 = scmp.ne.s32.totalorder %s100, %s101
      %p112 = scmp.eq.s32.totalorder %s24, 0
      %p113 = por %p111, %p112
      %p114 = scmp.ne.s32.totalorder %s100, %s101
      %p115 = scmp.eq.s32.totalorder %s25, 1
      %p116 = por %p114, %p115
      %p118 = scmp.ne.s32.totalorder %s101, %s117
      %p119 = scmp.eq.s32.totalorder %s25, 0
      %p120 = por %p118, %p119
      %s122 = sadd.s32 %s121, 1
      %p125 = scmp.eq.s32.totalorder %s19, 1
      %p126 = scmp.ne.s32.totalorder %s121, %s123
      %p127 = scmp.eq.s32.totalorder %s19, 0
      %p128 = por %p126, %p127
      %p129 = scmp.ne.s32.totalorder %s121, %s123
      %p130 = scmp.eq.s32.totalorder %s24, 1
      %p131 = por %p129, %p130
      %p132 = scmp.ne.s32.totalorder %s123, %s124
      %p133 = scmp.eq.s32.totalorder %s24, 0
      %p134 = por %p132, %p133
      %p135 = scmp.ne.s32.totalorder %s123, %s124
      %p136 = scmp.eq.s32.totalorder %s25, 1
      %p137 = por %p135, %p136
      %p139 = scmp.ne.s32.totalorder %s124, %s138
      %p140 = scmp.eq.s32.totalorder %s25, 0
      %p141 = por %p139, %p140
      %p142 = scmp.le.s32.totalorder 1, %s19
      %p143 = scmp.lt.s32.totalorder %s19, 3
      %p144 = pnand %p142, %p143
      %p145 = pneg %p144
      // Predicated region
      $region9: #{tpu_custom_call.1} parent=5 // pred_check
        _
      $region10: #{tpu_custom_call.1} parent=5 // pred_check_branch
        %147 = sbr.rel (%p144) target = $region12
      $region11: #{tpu_custom_call.1} parent=5 // pred_region
        %s148 = ssub.s32 %s19, 1
        // Predicated region
        $region13: #{tpu_custom_call.1} parent=11 // pred_check
          %p149 = pneg %p66
        $region14: #{tpu_custom_call.1} parent=11 // pred_check_branch
          %151 = sbr.rel (%p149) target = $region16
        $region15: #{tpu_custom_call.1} parent=11 // pred_region
          %s153 = ssub.s32 12288, 12288
          %154 = vsyncadd [#allocation6], %s153
          %s155 = sshll.u32 [#allocation5], 4
          %s156 = int_to_ptr.vmem [resolvable:$true] %s155
          %161 = dma.hbm_to_vmem [thread:$0]  %s1, 12288, %s156, [#allocation6], 128, 128, 8
        $region16: #{tpu_custom_call.1} parent=11 // pred_fallthru
          _
        // Predicated region
        $region17: #{tpu_custom_call.1} parent=11 // pred_check
          %p162 = pneg %p87
        $region18: #{tpu_custom_call.1} parent=11 // pred_check_branch
          %164 = sbr.rel (%p162) target = $region20
        $region19: #{tpu_custom_call.1} parent=11 // pred_region
          %s166 = ssub.s32 4096, 4096
          %167 = vsyncadd [#allocation6], %s166
          %s168 = sshll.u32 [#allocation7], 4
          %s169 = int_to_ptr.vmem [resolvable:$true] %s168
          %174 = dma.hbm_to_vmem [thread:$0]  %s2, 4096, %s169, [#allocation6], 128, 128, 8
        $region20: #{tpu_custom_call.1} parent=11 // pred_fallthru
          _
      $region12: #{tpu_custom_call.1} parent=5 // pred_fallthru
        _
      %p175 = scmp.lt.s32.totalorder %s19, 2
      // Predicated region
      $region21: #{tpu_custom_call.1} parent=5 // pred_check
        %p176 = pneg %p175
      $region22: #{tpu_custom_call.1} parent=5 // pred_check_branch
        %178 = sbr.rel (%p176) target = $region24
      $region23: #{tpu_custom_call.1} parent=5 // pred_region
        // Predicated region
        $region25: #{tpu_custom_call.1} parent=23 // pred_check
          %p179 = pneg %p39
        $region26: #{tpu_custom_call.1} parent=23 // pred_check_branch
          %181 = sbr.rel (%p179) target = $region28
        $region27: #{tpu_custom_call.1} parent=23 // pred_region
          %s182 = sand.u32 %s29, 1
          %s183 = scalar_lea.sflag [#allocation3], %s182
          %s184 = sand.u32 %s29, 1
          %s185 = smul.addr %s184, 192
          %s186 = scalar_lea.vmem [#allocation2], %s185
          %s187 = smul.u32 8, %s19
          %s189 = ssub.s32 3072, 3072
          %190 = vsyncadd %s183, %s189
          %s191 = smul.addr %s187, 6
          %s192 = smul.addr %s191, 64
          %s193 = scalar_lea.hbm %s0, %s192
          %s194 = sshll.u32 %s186, 4
          %s195 = int_to_ptr.vmem [resolvable:$true] %s194
          %200 = dma.hbm_to_vmem [thread:$0]  %s193, 3072, %s195, %s183, 384, 384, 24
        $region28: #{tpu_custom_call.1} parent=23 // pred_fallthru
          _
      $region24: #{tpu_custom_call.1} parent=5 // pred_fallthru
        _
      %p201 = scmp.le.s32.totalorder 1, %s19
      %p202 = scmp.lt.s32.totalorder %s19, 3
      %p203 = pnand %p201, %p202
      %p204 = pneg %p203
      // Predicated region
      $region29: #{tpu_custom_call.1} parent=5 // pred_check
        _
      $region30: #{tpu_custom_call.1} parent=5 // pred_check_branch
        %206 = sbr.rel (%p203) target = $region32
      $region31: #{tpu_custom_call.1} parent=5 // pred_region
        %s207 = ssub.s32 %s19, 1
        %s208 = sand.u32 %s32, 1
        %s209 = scalar_lea.sflag [#allocation3], %s208
        %s210 = sand.u32 %s32, 1
        %s211 = smul.addr %s210, 192
        %s212 = scalar_lea.vmem [#allocation2], %s211
        // Predicated region
        $region33: #{tpu_custom_call.1} parent=31 // pred_check
          %p213 = pneg %p45
        $region34: #{tpu_custom_call.1} parent=31 // pred_check_branch
          %215 = sbr.rel (%p213) target = $region36
        $region35: #{tpu_custom_call.1} parent=31 // pred_region
          %216 = dma.done %s209, 3072
        $region36: #{tpu_custom_call.1} parent=31 // pred_fallthru
          _
        // Predicated region
        $region37: #{tpu_custom_call.1} parent=31 // pred_check
          %p217 = pneg %p66
        $region38: #{tpu_custom_call.1} parent=31 // pred_check_branch
          %219 = sbr.rel (%p217) target = $region40
        $region39: #{tpu_custom_call.1} parent=31 // pred_region
          %220 = dma.done [#allocation6], 12288
        $region40: #{tpu_custom_call.1} parent=31 // pred_fallthru
          _
        // Predicated region
        $region41: #{tpu_custom_call.1} parent=31 // pred_check
          %p221 = pneg %p87
        $region42: #{tpu_custom_call.1} parent=31 // pred_check_branch
          %223 = sbr.rel (%p221) target = $region44
        $region43: #{tpu_custom_call.1} parent=31 // pred_region
          %224 = dma.done [#allocation6], 4096
        $region44: #{tpu_custom_call.1} parent=31 // pred_fallthru
          _
        %s225 = sand.u32 %s32, 1
        %s226 = scalar_lea.sflag [#allocation3], %s225
        %s227 = sand.u32 %s32, 1
        %s228 = smul.addr %s227, 192
        %s229 = scalar_lea.vmem [#allocation2], %s228
        %p230 = pneg %p45
        %p231 = pneg %p42
        %p232 = pneg %p66
        %p233 = pneg %p63
        %p234 = pneg %p87
        %p235 = pneg %p84
        %p236 = pneg %p113
        %p237 = pneg %p110
        %s238 = sand.u32 %s100, 1
        %s239 = scalar_lea.sflag [#allocation4], %s238
        %s240 = sand.u32 %s100, 1
        %s241 = smul.addr %s240, 128
        %s242 = scalar_lea.vmem [#allocation8], %s241
        %p243 = pneg %p134
        %p244 = pneg %p131
        %s245 = smul.u32 8, %s24
        %s246 = smul.u32 8, %s24
        %p247 = scmp.eq.s32.totalorder %s24, 0
        // Predicated region
        $region45: #{tpu_custom_call.1} parent=31 // pred_check
          %p248 = pneg %p247
        $region46: #{tpu_custom_call.1} parent=31 // pred_check_branch
          %250 = sbr.rel (%p248) target = $region48
        $region47: #{tpu_custom_call.1} parent=31 // pred_region
          %251 = vst [vmem:[#allocation9] sm:$0xf] 0.0
        $region48: #{tpu_custom_call.1} parent=31 // pred_fallthru
          _
        %v252 = vld [vmem:[%s212] sm:$0xff]
        %v253 = vld [vmem:[%s212 + $0x8] sm:$0xff]
        %v254 = vld [vmem:[%s212 + $0x10] sm:$0xff]
        %v255 = vld [vmem:[%s212 + $0x18] sm:$0xff]
        %v256 = vld [vmem:[%s212 + $0x20] sm:$0xff]
        %v257 = vld [vmem:[%s212 + $0x28] sm:$0xff]
        %v258 = vld [vmem:[%s212 + $0x30] sm:$0xff]
        %v259 = vld [vmem:[%s212 + $0x38] sm:$0xff]
        %v260 = vld [vmem:[%s212 + $0x40] sm:$0xff]
        %v261 = vld [vmem:[%s212 + $0x48] sm:$0xff]
        %v262 = vld [vmem:[%s212 + $0x50] sm:$0xff]
        %v263 = vld [vmem:[%s212 + $0x58] sm:$0xff]
        %v264 = vld [vmem:[%s212 + $0x60] sm:$0xff]
        %v265 = vld [vmem:[%s212 + $0x68] sm:$0xff]
        %v266 = vld [vmem:[%s212 + $0x70] sm:$0xff]
        %v267 = vld [vmem:[%s212 + $0x78] sm:$0xff]
        %v268 = vld [vmem:[%s212 + $0x80] sm:$0xff]
        %v269 = vld [vmem:[%s212 + $0x88] sm:$0xff]
        %v270 = vld [vmem:[%s212 + $0x90] sm:$0xff]
        %v271 = vld [vmem:[%s212 + $0x98] sm:$0xff]
        %v272 = vld [vmem:[%s212 + $0xa0] sm:$0xff]
        %v273 = vld [vmem:[%s212 + $0xa8] sm:$0xff]
        %v274 = vld [vmem:[%s212 + $0xb0] sm:$0xff]
        %v275 = vld [vmem:[%s212 + $0xb8] sm:$0xff]
        %v276 = vld [vmem:[#allocation5] sm:$0xff]
        %v277 = vld [vmem:[#allocation5 + $0x8] sm:$0xff]
        %v278 = vld [vmem:[#allocation5 + $0x10] sm:$0xff]
        %v279 = vld [vmem:[#allocation5 + $0x18] sm:$0xff]
        %v280 = vld [vmem:[#allocation5 + $0x20] sm:$0xff]
        %v281 = vld [vmem:[#allocation5 + $0x28] sm:$0xff]
        %v282 = vld [vmem:[#allocation5 + $0x30] sm:$0xff]
        %v283 = vld [vmem:[#allocation5 + $0x38] sm:$0xff]
        %v284 = vld [vmem:[#allocation5 + $0x40] sm:$0xff]
        %v285 = vld [vmem:[#allocation5 + $0x48] sm:$0xff]
        %v286 = vld [vmem:[#allocation5 + $0x50] sm:$0xff]
        %v287 = vld [vmem:[#allocation5 + $0x58] sm:$0xff]
        %v288 = vld [vmem:[#allocation5 + $0x60] sm:$0xff]
        %v289 = vld [vmem:[#allocation5 + $0x68] sm:$0xff]
        %v290 = vld [vmem:[#allocation5 + $0x70] sm:$0xff]
        %v291 = vld [vmem:[#allocation5 + $0x78] sm:$0xff]
        %v292 = vld [vmem:[#allocation5 + $0x80] sm:$0xff]
        %v293 = vld [vmem:[#allocation5 + $0x88] sm:$0xff]
        %v294 = vld [vmem:[#allocation5 + $0x90] sm:$0xff]
        %v295 = vld [vmem:[#allocation5 + $0x98] sm:$0xff]
        %v296 = vld [vmem:[#allocation5 + $0xa0] sm:$0xff]
        %v297 = vld [vmem:[#allocation5 + $0xa8] sm:$0xff]
        %v298 = vld [vmem:[#allocation5 + $0xb0] sm:$0xff]
        %v299 = vld [vmem:[#allocation5 + $0xb8] sm:$0xff]
        %v300 = vld [vmem:[#allocation5 + $0xc0] sm:$0xff]
        %v301 = vld [vmem:[#allocation5 + $0xc8] sm:$0xff]
        %v302 = vld [vmem:[#allocation5 + $0xd0] sm:$0xff]
        %v303 = vld [vmem:[#allocation5 + $0xd8] sm:$0xff]
        %v304 = vld [vmem:[#allocation5 + $0xe0] sm:$0xff]
        %v305 = vld [vmem:[#allocation5 + $0xe8] sm:$0xff]
        %v306 = vld [vmem:[#allocation5 + $0xf0] sm:$0xff]
        %v307 = vld [vmem:[#allocation5 + $0xf8] sm:$0xff]
        %v308 = vld [vmem:[#allocation5 + $0x100] sm:$0xff]
        %v309 = vld [vmem:[#allocation5 + $0x108] sm:$0xff]
        %v310 = vld [vmem:[#allocation5 + $0x110] sm:$0xff]
        %v311 = vld [vmem:[#allocation5 + $0x118] sm:$0xff]
        %v312 = vld [vmem:[#allocation5 + $0x120] sm:$0xff]
        %v313 = vld [vmem:[#allocation5 + $0x128] sm:$0xff]
        %v314 = vld [vmem:[#allocation5 + $0x130] sm:$0xff]
        %v315 = vld [vmem:[#allocation5 + $0x138] sm:$0xff]
        %v316 = vld [vmem:[#allocation5 + $0x140] sm:$0xff]
        %v317 = vld [vmem:[#allocation5 + $0x148] sm:$0xff]
        %v318 = vld [vmem:[#allocation5 + $0x150] sm:$0xff]
        %v319 = vld [vmem:[#allocation5 + $0x158] sm:$0xff]
        %v320 = vld [vmem:[#allocation5 + $0x160] sm:$0xff]
        %v321 = vld [vmem:[#allocation5 + $0x168] sm:$0xff]
        %v322 = vld [vmem:[#allocation5 + $0x170] sm:$0xff]
        %v323 = vld [vmem:[#allocation5 + $0x178] sm:$0xff]
        %v324 = vld [vmem:[#allocation5 + $0x180] sm:$0xff]
        %v325 = vld [vmem:[#allocation5 + $0x188] sm:$0xff]
        %v326 = vld [vmem:[#allocation5 + $0x190] sm:$0xff]
        %v327 = vld [vmem:[#allocation5 + $0x198] sm:$0xff]
        %v328 = vld [vmem:[#allocation5 + $0x1a0] sm:$0xff]
        %v329 = vld [vmem:[#allocation5 + $0x1a8] sm:$0xff]
        %v330 = vld [vmem:[#allocation5 + $0x1b0] sm:$0xff]
        %v331 = vld [vmem:[#allocation5 + $0x1b8] sm:$0xff]
        %v332 = vld [vmem:[#allocation5 + $0x1c0] sm:$0xff]
        %v333 = vld [vmem:[#allocation5 + $0x1c8] sm:$0xff]
        %v334 = vld [vmem:[#allocation5 + $0x1d0] sm:$0xff]
        %v335 = vld [vmem:[#allocation5 + $0x1d8] sm:$0xff]
        %v336 = vld [vmem:[#allocation5 + $0x1e0] sm:$0xff]
        %v337 = vld [vmem:[#allocation5 + $0x1e8] sm:$0xff]
        %v338 = vld [vmem:[#allocation5 + $0x1f0] sm:$0xff]
        %v339 = vld [vmem:[#allocation5 + $0x1f8] sm:$0xff]
        %v340 = vld [vmem:[#allocation5 + $0x200] sm:$0xff]
        %v341 = vld [vmem:[#allocation5 + $0x208] sm:$0xff]
        %v342 = vld [vmem:[#allocation5 + $0x210] sm:$0xff]
        %v343 = vld [vmem:[#allocation5 + $0x218] sm:$0xff]
        %v344 = vld [vmem:[#allocation5 + $0x220] sm:$0xff]
        %v345 = vld [vmem:[#allocation5 + $0x228] sm:$0xff]
        %v346 = vld [vmem:[#allocation5 + $0x230] sm:$0xff]
        %v347 = vld [vmem:[#allocation5 + $0x238] sm:$0xff]
        %v348 = vld [vmem:[#allocation5 + $0x240] sm:$0xff]
        %v349 = vld [vmem:[#allocation5 + $0x248] sm:$0xff]
        %v350 = vld [vmem:[#allocation5 + $0x250] sm:$0xff]
        %v351 = vld [vmem:[#allocation5 + $0x258] sm:$0xff]
        %v352 = vld [vmem:[#allocation5 + $0x260] sm:$0xff]
        %v353 = vld [vmem:[#allocation5 + $0x268] sm:$0xff]
        %v354 = vld [vmem:[#allocation5 + $0x270] sm:$0xff]
        %v355 = vld [vmem:[#allocation5 + $0x278] sm:$0xff]
        %v356 = vld [vmem:[#allocation5 + $0x280] sm:$0xff]
        %v357 = vld [vmem:[#allocation5 + $0x288] sm:$0xff]
        %v358 = vld [vmem:[#allocation5 + $0x290] sm:$0xff]
        %v359 = vld [vmem:[#allocation5 + $0x298] sm:$0xff]
        %v360 = vld [vmem:[#allocation5 + $0x2a0] sm:$0xff]
        %v361 = vld [vmem:[#allocation5 + $0x2a8] sm:$0xff]
        %v362 = vld [vmem:[#allocation5 + $0x2b0] sm:$0xff]
        %v363 = vld [vmem:[#allocation5 + $0x2b8] sm:$0xff]
        %v364 = vld [vmem:[#allocation5 + $0x2c0] sm:$0xff]
        %v365 = vld [vmem:[#allocation5 + $0x2c8] sm:$0xff]
        %v366 = vld [vmem:[#allocation5 + $0x2d0] sm:$0xff]
        %v367 = vld [vmem:[#allocation5 + $0x2d8] sm:$0xff]
        %v368 = vld [vmem:[#allocation5 + $0x2e0] sm:$0xff]
        %v369 = vld [vmem:[#allocation5 + $0x2e8] sm:$0xff]
        %v370 = vld [vmem:[#allocation5 + $0x2f0] sm:$0xff]
        %v371 = vld [vmem:[#allocation5 + $0x2f8] sm:$0xff]
        %v396 = vunpack.c.l.b16 %v252
        %v397 = vunpack.c.h.b16 %v252
        %v398 = vunpack.c.l.b16 %v253
        %v399 = vunpack.c.h.b16 %v253
        %v400 = vunpack.c.l.b16 %v254
        %v401 = vunpack.c.h.b16 %v254
        %v402 = vunpack.c.l.b16 %v255
        %v403 = vunpack.c.h.b16 %v255
        %v404 = vunpack.c.l.b16 %v256
        %v405 = vunpack.c.h.b16 %v256
        %v406 = vunpack.c.l.b16 %v257
        %v407 = vunpack.c.h.b16 %v257
        %v408 = vunpack.c.l.b16 %v258
        %v409 = vunpack.c.h.b16 %v258
        %v410 = vunpack.c.l.b16 %v259
        %v411 = vunpack.c.h.b16 %v259
        %v412 = vunpack.c.l.b16 %v260
        %v413 = vunpack.c.h.b16 %v260
        %v414 = vunpack.c.l.b16 %v261
        %v415 = vunpack.c.h.b16 %v261
        %v416 = vunpack.c.l.b16 %v262
        %v417 = vunpack.c.h.b16 %v262
        %v418 = vunpack.c.l.b16 %v263
        %v419 = vunpack.c.h.b16 %v263
        %v420 = vunpack.c.l.b16 %v264
        %v421 = vunpack.c.h.b16 %v264
        %v422 = vunpack.c.l.b16 %v265
        %v423 = vunpack.c.h.b16 %v265
        %v424 = vunpack.c.l.b16 %v266
        %v425 = vunpack.c.h.b16 %v266
        %v426 = vunpack.c.l.b16 %v267
        %v427 = vunpack.c.h.b16 %v267
        %v428 = vunpack.c.l.b16 %v268
        %v429 = vunpack.c.h.b16 %v268
        %v430 = vunpack.c.l.b16 %v269
        %v431 = vunpack.c.h.b16 %v269
        %v432 = vunpack.c.l.b16 %v270
        %v433 = vunpack.c.h.b16 %v270
        %v434 = vunpack.c.l.b16 %v271
        %v435 = vunpack.c.h.b16 %v271
        %v436 = vunpack.c.l.b16 %v272
        %v437 = vunpack.c.h.b16 %v272
        %v438 = vunpack.c.l.b16 %v273
        %v439 = vunpack.c.h.b16 %v273
        %v440 = vunpack.c.l.b16 %v274
        %v441 = vunpack.c.h.b16 %v274
        %v442 = vunpack.c.l.b16 %v275
        %v443 = vunpack.c.h.b16 %v275
        %v444 = vpack.c.b16 %v402, %v396
        %v445 = vpack.c.b16 %v403, %v397
        %v446 = vpack.c.b16 %v404, %v398
        %v447 = vpack.c.b16 %v405, %v399
        %v448 = vpack.c.b16 %v406, %v400
        %v449 = vpack.c.b16 %v407, %v401
        %v450 = vpack.c.b16 %v414, %v408
        %v451 = vpack.c.b16 %v415, %v409
        %v452 = vpack.c.b16 %v416, %v410
        %v453 = vpack.c.b16 %v417, %v411
        %v454 = vpack.c.b16 %v418, %v412
        %v455 = vpack.c.b16 %v419, %v413
        %v456 = vpack.c.b16 %v426, %v420
        %v457 = vpack.c.b16 %v427, %v421
        %v458 = vpack.c.b16 %v428, %v422
        %v459 = vpack.c.b16 %v429, %v423
        %v460 = vpack.c.b16 %v430, %v424
        %v461 = vpack.c.b16 %v431, %v425
        %v462 = vpack.c.b16 %v438, %v432
        %v463 = vpack.c.b16 %v439, %v433
        %v464 = vpack.c.b16 %v440, %v434
        %v465 = vpack.c.b16 %v441, %v435
        %v466 = vpack.c.b16 %v442, %v436
        %v467 = vpack.c.b16 %v443, %v437
        %v588 = vunpack.c.l.b16 %v276
        %v589 = vunpack.c.h.b16 %v276
        %v590 = vunpack.c.l.b16 %v277
        %v591 = vunpack.c.h.b16 %v277
        %v592 = vunpack.c.l.b16 %v278
        %v593 = vunpack.c.h.b16 %v278
        %v594 = vunpack.c.l.b16 %v279
        %v595 = vunpack.c.h.b16 %v279
        %v596 = vunpack.c.l.b16 %v280
        %v597 = vunpack.c.h.b16 %v280
        %v598 = vunpack.c.l.b16 %v281
        %v599 = vunpack.c.h.b16 %v281
        %v600 = vunpack.c.l.b16 %v282
        %v601 = vunpack.c.h.b16 %v282
        %v602 = vunpack.c.l.b16 %v283
        %v603 = vunpack.c.h.b16 %v283
        %v604 = vunpack.c.l.b16 %v284
        %v605 = vunpack.c.h.b16 %v284
        %v606 = vunpack.c.l.b16 %v285
        %v607 = vunpack.c.h.b16 %v285
        %v608 = vunpack.c.l.b16 %v286
        %v609 = vunpack.c.h.b16 %v286
        %v610 = vunpack.c.l.b16 %v287
        %v611 = vunpack.c.h.b16 %v287
        %v612 = vunpack.c.l.b16 %v288
        %v613 = vunpack.c.h.b16 %v288
        %v614 = vunpack.c.l.b16 %v289
        %v615 = vunpack.c.h.b16 %v289
        %v616 = vunpack.c.l.b16 %v290
        %v617 = vunpack.c.h.b16 %v290
        %v618 = vunpack.c.l.b16 %v291
        %v619 = vunpack.c.h.b16 %v291
        %v620 = vunpack.c.l.b16 %v292
        %v621 = vunpack.c.h.b16 %v292
        %v622 = vunpack.c.l.b16 %v293
        %v623 = vunpack.c.h.b16 %v293
        %v624 = vunpack.c.l.b16 %v294
        %v625 = vunpack.c.h.b16 %v294
        %v626 = vunpack.c.l.b16 %v295
        %v627 = vunpack.c.h.b16 %v295
        %v628 = vunpack.c.l.b16 %v296
        %v629 = vunpack.c.h.b16 %v296
        %v630 = vunpack.c.l.b16 %v297
        %v631 = vunpack.c.h.b16 %v297
        %v632 = vunpack.c.l.b16 %v298
        %v633 = vunpack.c.h.b16 %v298
        %v634 = vunpack.c.l.b16 %v299
        %v635 = vunpack.c.h.b16 %v299
        %v636 = vunpack.c.l.b16 %v300
        %v637 = vunpack.c.h.b16 %v300
        %v638 = vunpack.c.l.b16 %v301
        %v639 = vunpack.c.h.b16 %v301
        %v640 = vunpack.c.l.b16 %v302
        %v641 = vunpack.c.h.b16 %v302
        %v642 = vunpack.c.l.b16 %v303
        %v643 = vunpack.c.h.b16 %v303
        %v644 = vunpack.c.l.b16 %v304
        %v645 = vunpack.c.h.b16 %v304
        %v646 = vunpack.c.l.b16 %v305
        %v647 = vunpack.c.h.b16 %v305
        %v648 = vunpack.c.l.b16 %v306
        %v649 = vunpack.c.h.b16 %v306
        %v650 = vunpack.c.l.b16 %v307
        %v651 = vunpack.c.h.b16 %v307
        %v652 = vunpack.c.l.b16 %v308
        %v653 = vunpack.c.h.b16 %v308
        %v654 = vunpack.c.l.b16 %v309
        %v655 = vunpack.c.h.b16 %v309
        %v656 = vunpack.c.l.b16 %v310
        %v657 = vunpack.c.h.b16 %v310
        %v658 = vunpack.c.l.b16 %v311
        %v659 = vunpack.c.h.b16 %v311
        %v660 = vunpack.c.l.b16 %v312
        %v661 = vunpack.c.h.b16 %v312
        %v662 = vunpack.c.l.b16 %v313
        %v663 = vunpack.c.h.b16 %v313
        %v664 = vunpack.c.l.b16 %v314
        %v665 = vunpack.c.h.b16 %v314
        %v666 = vunpack.c.l.b16 %v315
        %v667 = vunpack.c.h.b16 %v315
        %v668 = vunpack.c.l.b16 %v316
        %v669 = vunpack.c.h.b16 %v316
        %v670 = vunpack.c.l.b16 %v317
        %v671 = vunpack.c.h.b16 %v317
        %v672 = vunpack.c.l.b16 %v318
        %v673 = vunpack.c.h.b16 %v318
        %v674 = vunpack.c.l.b16 %v319
        %v675 = vunpack.c.h.b16 %v319
        %v676 = vunpack.c.l.b16 %v320
        %v677 = vunpack.c.h.b16 %v320
        %v678 = vunpack.c.l.b16 %v321
        %v679 = vunpack.c.h.b16 %v321
        %v680 = vunpack.c.l.b16 %v322
        %v681 = vunpack.c.h.b16 %v322
        %v682 = vunpack.c.l.b16 %v323
        %v683 = vunpack.c.h.b16 %v323
        %v684 = vunpack.c.l.b16 %v324
        %v685 = vunpack.c.h.b16 %v324
        %v686 = vunpack.c.l.b16 %v325
        %v687 = vunpack.c.h.b16 %v325
        %v688 = vunpack.c.l.b16 %v326
        %v689 = vunpack.c.h.b16 %v326
        %v690 = vunpack.c.l.b16 %v327
        %v691 = vunpack.c.h.b16 %v327
        %v692 = vunpack.c.l.b16 %v328
        %v693 = vunpack.c.h.b16 %v328
        %v694 = vunpack.c.l.b16 %v329
        %v695 = vunpack.c.h.b16 %v329
        %v696 = vunpack.c.l.b16 %v330
        %v697 = vunpack.c.h.b16 %v330
        %v698 = vunpack.c.l.b16 %v331
        %v699 = vunpack.c.h.b16 %v331
        %v700 = vunpack.c.l.b16 %v332
        %v701 = vunpack.c.h.b16 %v332
        %v702 = vunpack.c.l.b16 %v333
        %v703 = vunpack.c.h.b16 %v333
        %v704 = vunpack.c.l.b16 %v334
        %v705 = vunpack.c.h.b16 %v334
        %v706 = vunpack.c.l.b16 %v335
        %v707 = vunpack.c.h.b16 %v335
        %v708 = vunpack.c.l.b16 %v336
        %v709 = vunpack.c.h.b16 %v336
        %v710 = vunpack.c.l.b16 %v337
        %v711 = vunpack.c.h.b16 %v337
        %v712 = vunpack.c.l.b16 %v338
        %v713 = vunpack.c.h.b16 %v338
        %v714 = vunpack.c.l.b16 %v339
        %v715 = vunpack.c.h.b16 %v339
        %v716 = vunpack.c.l.b16 %v340
        %v717 = vunpack.c.h.b16 %v340
        %v718 = vunpack.c.l.b16 %v341
        %v719 = vunpack.c.h.b16 %v341
        %v720 = vunpack.c.l.b16 %v342
        %v721 = vunpack.c.h.b16 %v342
        %v722 = vunpack.c.l.b16 %v343
        %v723 = vunpack.c.h.b16 %v343
        %v724 = vunpack.c.l.b16 %v344
        %v725 = vunpack.c.h.b16 %v344
        %v726 = vunpack.c.l.b16 %v345
        %v727 = vunpack.c.h.b16 %v345
        %v728 = vunpack.c.l.b16 %v346
        %v729 = vunpack.c.h.b16 %v346
        %v730 = vunpack.c.l.b16 %v347
        %v731 = vunpack.c.h.b16 %v347
        %v732 = vunpack.c.l.b16 %v348
        %v733 = vunpack.c.h.b16 %v348
        %v734 = vunpack.c.l.b16 %v349
        %v735 = vunpack.c.h.b16 %v349
        %v736 = vunpack.c.l.b16 %v350
        %v737 = vunpack.c.h.b16 %v350
        %v738 = vunpack.c.l.b16 %v351
        %v739 = vunpack.c.h.b16 %v351
        %v740 = vunpack.c.l.b16 %v352
        %v741 = vunpack.c.h.b16 %v352
        %v742 = vunpack.c.l.b16 %v353
        %v743 = vunpack.c.h.b16 %v353
        %v744 = vunpack.c.l.b16 %v354
        %v745 = vunpack.c.h.b16 %v354
        %v746 = vunpack.c.l.b16 %v355
        %v747 = vunpack.c.h.b16 %v355
        %v748 = vunpack.c.l.b16 %v356
        %v749 = vunpack.c.h.b16 %v356
        %v750 = vunpack.c.l.b16 %v357
        %v751 = vunpack.c.h.b16 %v357
        %v752 = vunpack.c.l.b16 %v358
        %v753 = vunpack.c.h.b16 %v358
        %v754 = vunpack.c.l.b16 %v359
        %v755 = vunpack.c.h.b16 %v359
        %v756 = vunpack.c.l.b16 %v360
        %v757 = vunpack.c.h.b16 %v360
        %v758 = vunpack.c.l.b16 %v361
        %v759 = vunpack.c.h.b16 %v361
        %v760 = vunpack.c.l.b16 %v362
        %v761 = vunpack.c.h.b16 %v362
        %v762 = vunpack.c.l.b16 %v363
        %v763 = vunpack.c.h.b16 %v363
        %v764 = vunpack.c.l.b16 %v364
        %v765 = vunpack.c.h.b16 %v364
        %v766 = vunpack.c.l.b16 %v365
        %v767 = vunpack.c.h.b16 %v365
        %v768 = vunpack.c.l.b16 %v366
        %v769 = vunpack.c.h.b16 %v366
        %v770 = vunpack.c.l.b16 %v367
        %v771 = vunpack.c.h.b16 %v367
        %v772 = vunpack.c.l.b16 %v368
        %v773 = vunpack.c.h.b16 %v368
        %v774 = vunpack.c.l.b16 %v369
        %v775 = vunpack.c.h.b16 %v369
        %v776 = vunpack.c.l.b16 %v370
        %v777 = vunpack.c.h.b16 %v370
        %v778 = vunpack.c.l.b16 %v371
        %v779 = vunpack.c.h.b16 %v371
        %v780 = vpack.c.b16 %v590, %v588
        %v781 = vpack.c.b16 %v591, %v589
        %v782 = vpack.c.b16 %v594, %v592
        %v783 = vpack.c.b16 %v595, %v593
        %v784 = vpack.c.b16 %v598, %v596
        %v785 = vpack.c.b16 %v599, %v597
        %v786 = vpack.c.b16 %v602, %v600
        %v787 = vpack.c.b16 %v603, %v601
        %v788 = vpack.c.b16 %v606, %v604
        %v789 = vpack.c.b16 %v607, %v605
        %v790 = vpack.c.b16 %v610, %v608
        %v791 = vpack.c.b16 %v611, %v609
        %v792 = vpack.c.b16 %v614, %v612
        %v793 = vpack.c.b16 %v615, %v613
        %v794 = vpack.c.b16 %v618, %v616
        %v795 = vpack.c.b16 %v619, %v617
        %v796 = vpack.c.b16 %v622, %v620
        %v797 = vpack.c.b16 %v623, %v621
        %v798 = vpack.c.b16 %v626, %v624
        %v799 = vpack.c.b16 %v627, %v625
        %v800 = vpack.c.b16 %v630, %v628
        %v801 = vpack.c.b16 %v631, %v629
        %v802 = vpack.c.b16 %v634, %v632
        %v803 = vpack.c.b16 %v635, %v633
        %v804 = vpack.c.b16 %v638, %v636
        %v805 = vpack.c.b16 %v639, %v637
        %v806 = vpack.c.b16 %v642, %v640
        %v807 = vpack.c.b16 %v643, %v641
        %v808 = vpack.c.b16 %v646, %v644
        %v809 = vpack.c.b16 %v647, %v645
        %v810 = vpack.c.b16 %v650, %v648
        %v811 = vpack.c.b16 %v651, %v649
        %v812 = vpack.c.b16 %v654, %v652
        %v813 = vpack.c.b16 %v655, %v653
        %v814 = vpack.c.b16 %v658, %v656
        %v815 = vpack.c.b16 %v659, %v657
        %v816 = vpack.c.b16 %v662, %v660
        %v817 = vpack.c.b16 %v663, %v661
        %v818 = vpack.c.b16 %v666, %v664
        %v819 = vpack.c.b16 %v667, %v665
        %v820 = vpack.c.b16 %v670, %v668
        %v821 = vpack.c.b16 %v671, %v669
        %v822 = vpack.c.b16 %v674, %v672
        %v823 = vpack.c.b16 %v675, %v673
        %v824 = vpack.c.b16 %v678, %v676
        %v825 = vpack.c.b16 %v679, %v677
        %v826 = vpack.c.b16 %v682, %v680
        %v827 = vpack.c.b16 %v683, %v681
        %v828 = vpack.c.b16 %v686, %v684
        %v829 = vpack.c.b16 %v687, %v685
        %v830 = vpack.c.b16 %v690, %v688
        %v831 = vpack.c.b16 %v691, %v689
        %v832 = vpack.c.b16 %v694, %v692
        %v833 = vpack.c.b16 %v695, %v693
        %v834 = vpack.c.b16 %v698, %v696
        %v835 = vpack.c.b16 %v699, %v697
        %v836 = vpack.c.b16 %v702, %v700
        %v837 = vpack.c.b16 %v703, %v701
        %v838 = vpack.c.b16 %v706, %v704
        %v839 = vpack.c.b16 %v707, %v705
        %v840 = vpack.c.b16 %v710, %v708
        %v841 = vpack.c.b16 %v711, %v709
        %v842 = vpack.c.b16 %v714, %v712
        %v843 = vpack.c.b16 %v715, %v713
        %v844 = vpack.c.b16 %v718, %v716
        %v845 = vpack.c.b16 %v719, %v717
        %v846 = vpack.c.b16 %v722, %v720
        %v847 = vpack.c.b16 %v723, %v721
        %v848 = vpack.c.b16 %v726, %v724
        %v849 = vpack.c.b16 %v727, %v725
        %v850 = vpack.c.b16 %v730, %v728
        %v851 = vpack.c.b16 %v731, %v729
        %v852 = vpack.c.b16 %v734, %v732
        %v853 = vpack.c.b16 %v735, %v733
        %v854 = vpack.c.b16 %v738, %v736
        %v855 = vpack.c.b16 %v739, %v737
        %v856 = vpack.c.b16 %v742, %v740
        %v857 = vpack.c.b16 %v743, %v741
        %v858 = vpack.c.b16 %v746, %v744
        %v859 = vpack.c.b16 %v747, %v745
        %v860 = vpack.c.b16 %v750, %v748
        %v861 = vpack.c.b16 %v751, %v749
        %v862 = vpack.c.b16 %v754, %v752
        %v863 = vpack.c.b16 %v755, %v753
        %v864 = vpack.c.b16 %v758, %v756
        %v865 = vpack.c.b16 %v759, %v757
        %v866 = vpack.c.b16 %v762, %v760
        %v867 = vpack.c.b16 %v763, %v761
        %v868 = vpack.c.b16 %v766, %v764
        %v869 = vpack.c.b16 %v767, %v765
        %v870 = vpack.c.b16 %v770, %v768
        %v871 = vpack.c.b16 %v771, %v769
        %v872 = vpack.c.b16 %v774, %v772
        %v873 = vpack.c.b16 %v775, %v773
        %v874 = vpack.c.b16 %v778, %v776
        %v875 = vpack.c.b16 %v779, %v777
        %972 = vmatprep.subr.bf16.mxu0 %v781
        %973 = vmatpush1.bf16.msra.mxu0 %v780
        %974 = vmatprep.subr.bf16.mxu0 %v783
        %975 = vmatpush1.bf16.msra.mxu0 %v782
        %976 = vmatprep.subr.bf16.mxu0 %v785
        %977 = vmatpush1.bf16.msra.mxu0 %v784
        %978 = vmatprep.subr.bf16.mxu0 %v787
        %979 = vmatpush1.bf16.msra.mxu0 %v786
        %980 = vmatprep.subr.bf16.mxu0 %v789
        %981 = vmatpush1.bf16.msra.mxu0 %v788
        %982 = vmatprep.subr.bf16.mxu0 %v791
        %983 = vmatpush1.bf16.msra.mxu0 %v790
        %984 = vmatprep.subr.bf16.mxu0 %v793
        %985 = vmatpush1.bf16.msra.mxu0 %v792
        %986 = vmatprep.subr.bf16.mxu0 %v795
        %987 = vmatpush1.bf16.msra.mxu0 %v794
        %988 = vmatprep.subr.bf16.mxu0 %v797
        %989 = vmatpush1.bf16.msra.mxu0 %v796
        %990 = vmatprep.subr.bf16.mxu0 %v799
        %991 = vmatpush1.bf16.msra.mxu0 %v798
        %992 = vmatprep.subr.bf16.mxu0 %v801
        %993 = vmatpush1.bf16.msra.mxu0 %v800
        %994 = vmatprep.subr.bf16.mxu0 %v803
        %995 = vmatpush1.bf16.msra.mxu0 %v802
        %996 = vmatprep.subr.bf16.mxu0 %v805
        %997 = vmatpush1.bf16.msra.mxu0 %v804
        %998 = vmatprep.subr.bf16.mxu0 %v807
        %999 = vmatpush1.bf16.msra.mxu0 %v806
        %1000 = vmatprep.subr.bf16.mxu0 %v809
        %1001 = vmatpush1.bf16.msra.mxu0 %v808
        %1002 = vmatprep.subr.bf16.mxu0 %v811
        %1003 = vmatpush1.bf16.msra.mxu0 %v810
        %1004 = vmatprep.mubr.bf16.mxu0 %v445
        %1005 = vmatmul.mubr.bf16.gmra.mrb[0].mxu0 %v444
        %v1006 = vpop.f32.mrb[0].mxu0
        %v1007 = vadd.f32 0.0, %v1006
        %v1008 = vpop.f32.mrb[0].mxu0
        %v1009 = vadd.f32 0.0, %v1008
        %v1010 = vpop.f32.mrb[0].mxu0
        %v1011 = vadd.f32 0.0, %v1010
        %v1012 = vpop.f32.mrb[0].mxu0
        %v1013 = vadd.f32 0.0, %v1012
        %1014 = vmatprep.mubr.bf16.mxu0 %v451
        %1015 = vmatmul.mubr.bf16.gmra.mrb[0].mxu0 %v450
        %v1016 = vpop.f32.mrb[0].mxu0
        %v1017 = vadd.f32 0.0, %v1016
        %v1018 = vpop.f32.mrb[0].mxu0
        %v1019 = vadd.f32 0.0, %v1018
        %v1020 = vpop.f32.mrb[0].mxu0
        %v1021 = vadd.f32 0.0, %v1020
        %v1022 = vpop.f32.mrb[0].mxu0
        %v1023 = vadd.f32 0.0, %v1022
        %1024 = vmatprep.mubr.bf16.mxu0 %v457
        %1025 = vmatmul.mubr.bf16.gmra.mrb[0].mxu0 %v456
        %v1026 = vpop.f32.mrb[0].mxu0
        %v1027 = vadd.f32 0.0, %v1026
        %v1028 = vpop.f32.mrb[0].mxu0
        %v1029 = vadd.f32 0.0, %v1028
        %v1030 = vpop.f32.mrb[0].mxu0
        %v1031 = vadd.f32 0.0, %v1030
        %v1032 = vpop.f32.mrb[0].mxu0
        %v1033 = vadd.f32 0.0, %v1032
        %1034 = vmatprep.mubr.bf16.mxu0 %v463
        %1035 = vmatmul.mubr.bf16.gmra.mrb[0].mxu0 %v462
        %v1036 = vpop.f32.mrb[0].mxu0
        %v1037 = vadd.f32 0.0, %v1036
        %v1038 = vpop.f32.mrb[0].mxu0
        %v1039 = vadd.f32 0.0, %v1038
        %v1040 = vpop.f32.mrb[0].mxu0
        %v1041 = vadd.f32 0.0, %v1040
        %v1042 = vpop.f32.mrb[0].mxu0
        %v1043 = vadd.f32 0.0, %v1042
        %1044 = vdwg.mxu0
        %1045 = vmatprep.subr.bf16.mxu0 %v813
        %1046 = vmatpush1.bf16.msra.mxu0 %v812
        %1047 = vmatprep.subr.bf16.mxu0 %v815
        %1048 = vmatpush1.bf16.msra.mxu0 %v814
        %1049 = vmatprep.subr.bf16.mxu0 %v817
        %1050 = vmatpush1.bf16.msra.mxu0 %v816
        %1051 = vmatprep.subr.bf16.mxu0 %v819
        %1052 = vmatpush1.bf16.msra.mxu0 %v818
        %1053 = vmatprep.subr.bf16.mxu0 %v821
        %1054 = vmatpush1.bf16.msra.mxu0 %v820
        %1055 = vmatprep.subr.bf16.mxu0 %v823
        %1056 = vmatpush1.bf16.msra.mxu0 %v822
        %1057 = vmatprep.subr.bf16.mxu0 %v825
        %1058 = vmatpush1.bf16.msra.mxu0 %v824
        %1059 = vmatprep.subr.bf16.mxu0 %v827
        %1060 = vmatpush1.bf16.msra.mxu0 %v826
        %1061 = vmatprep.subr.bf16.mxu0 %v829
        %1062 = vmatpush1.bf16.msra.mxu0 %v828
        %1063 = vmatprep.subr.bf16.mxu0 %v831
        %1064 = vmatpush1.bf16.msra.mxu0 %v830
        %1065 = vmatprep.subr.bf16.mxu0 %v833
        %1066 = vmatpush1.bf16.msra.mxu0 %v832
        %1067 = vmatprep.subr.bf16.mxu0 %v835
        %1068 = vmatpush1.bf16.msra.mxu0 %v834
        %1069 = vmatprep.subr.bf16.mxu0 %v837
        %1070 = vmatpush1.bf16.msra.mxu0 %v836
        %1071 = vmatprep.subr.bf16.mxu0 %v839
        %1072 = vmatpush1.bf16.msra.mxu0 %v838
        %1073 = vmatprep.subr.bf16.mxu0 %v841
        %1074 = vmatpush1.bf16.msra.mxu0 %v840
        %1075 = vmatprep.subr.bf16.mxu0 %v843
        %1076 = vmatpush1.bf16.msra.mxu0 %v842
        %1077 = vmatprep.mubr.bf16.mxu0 %v447
        %1078 = vmatmul.mubr.bf16.gmra.mrb[0].mxu0 %v446
        %v1079 = vpop.f32.mrb[0].mxu0
        %v1080 = vadd.f32 %v1007, %v1079
        %v1081 = vpop.f32.mrb[0].mxu0
        %v1082 = vadd.f32 %v1009, %v1081
        %v1083 = vpop.f32.mrb[0].mxu0
        %v1084 = vadd.f32 %v1011, %v1083
        %v1085 = vpop.f32.mrb[0].mxu0
        %v1086 = vadd.f32 %v1013, %v1085
        %1087 = vmatprep.mubr.bf16.mxu0 %v453
        %1088 = vmatmul.mubr.bf16.gmra.mrb[0].mxu0 %v452
        %v1089 = vpop.f32.mrb[0].mxu0
        %v1090 = vadd.f32 %v1017, %v1089
        %v1091 = vpop.f32.mrb[0].mxu0
        %v1092 = vadd.f32 %v1019, %v1091
        %v1093 = vpop.f32.mrb[0].mxu0
        %v1094 = vadd.f32 %v1021, %v1093
        %v1095 = vpop.f32.mrb[0].mxu0
        %v1096 = vadd.f32 %v1023, %v1095
        %1097 = vmatprep.mubr.bf16.mxu0 %v459
        %1098 = vmatmul.mubr.bf16.gmra.mrb[0].mxu0 %v458
        %v1099 = vpop.f32.mrb[0].mxu0
        %v1100 = vadd.f32 %v1027, %v1099
        %v1101 = vpop.f32.mrb[0].mxu0
        %v1102 = vadd.f32 %v1029, %v1101
        %v1103 = vpop.f32.mrb[0].mxu0
        %v1104 = vadd.f32 %v1031, %v1103
        %v1105 = vpop.f32.mrb[0].mxu0
        %v1106 = vadd.f32 %v1033, %v1105
        %1107 = vmatprep.mubr.bf16.mxu0 %v465
        %1108 = vmatmul.mubr.bf16.gmra.mrb[0].mxu0 %v464
        %v1109 = vpop.f32.mrb[0].mxu0
        %v1110 = vadd.f32 %v1037, %v1109
        %v1111 = vpop.f32.mrb[0].mxu0
        %v1112 = vadd.f32 %v1039, %v1111
        %v1113 = vpop.f32.mrb[0].mxu0
        %v1114 = vadd.f32 %v1041, %v1113
        %v1115 = vpop.f32.mrb[0].mxu0
        %v1116 = vadd.f32 %v1043, %v1115
        %1117 = vdwg.mxu0
        %1118 = vmatprep.subr.bf16.mxu0 %v845
        %1119 = vmatpush1.bf16.msra.mxu0 %v844
        %1120 = vmatprep.subr.bf16.mxu0 %v847
        %1121 = vmatpush1.bf16.msra.mxu0 %v846
        %1122 = vmatprep.subr.bf16.mxu0 %v849
        %1123 = vmatpush1.bf16.msra.mxu0 %v848
        %1124 = vmatprep.subr.bf16.mxu0 %v851
        %1125 = vmatpush1.bf16.msra.mxu0 %v850
        %1126 = vmatprep.subr.bf16.mxu0 %v853
        %1127 = vmatpush1.bf16.msra.mxu0 %v852
        %1128 = vmatprep.subr.bf16.mxu0 %v855
        %1129 = vmatpush1.bf16.msra.mxu0 %v854
        %1130 = vmatprep.subr.bf16.mxu0 %v857
        %1131 = vmatpush1.bf16.msra.mxu0 %v856
        %1132 = vmatprep.subr.bf16.mxu0 %v859
        %1133 = vmatpush1.bf16.msra.mxu0 %v858
        %1134 = vmatprep.subr.bf16.mxu0 %v861
        %1135 = vmatpush1.bf16.msra.mxu0 %v860
        %1136 = vmatprep.subr.bf16.mxu0 %v863
        %1137 = vmatpush1.bf16.msra.mxu0 %v862
        %1138 = vmatprep.subr.bf16.mxu0 %v865
        %1139 = vmatpush1.bf16.msra.mxu0 %v864
        %1140 = vmatprep.subr.bf16.mxu0 %v867
        %1141 = vmatpush1.bf16.msra.mxu0 %v866
        %1142 = vmatprep.subr.bf16.mxu0 %v869
        %1143 = vmatpush1.bf16.msra.mxu0 %v868
        %1144 = vmatprep.subr.bf16.mxu0 %v871
        %1145 = vmatpush1.bf16.msra.mxu0 %v870
        %1146 = vmatprep.subr.bf16.mxu0 %v873
        %1147 = vmatpush1.bf16.msra.mxu0 %v872
        %1148 = vmatprep.subr.bf16.mxu0 %v875
        %1149 = vmatpush1.bf16.msra.mxu0 %v874
        %1150 = vmatprep.mubr.bf16.mxu0 %v449
        %1151 = vmatmul.mubr.bf16.gmra.mrb[0].mxu0 %v448
        %v1152 = vpop.f32.mrb[0].mxu0
        %v1153 = vadd.f32 %v1080, %v1152
        %v1154 = vpop.f32.mrb[0].mxu0
        %v1155 = vadd.f32 %v1082, %v1154
        %v1156 = vpop.f32.mrb[0].mxu0
        %v1157 = vadd.f32 %v1084, %v1156
        %v1158 = vpop.f32.mrb[0].mxu0
        %v1159 = vadd.f32 %v1086, %v1158
        %1160 = vmatprep.mubr.bf16.mxu0 %v455
        %1161 = vmatmul.mubr.bf16.gmra.mrb[0].mxu0 %v454
        %v1162 = vpop.f32.mrb[0].mxu0
        %v1163 = vadd.f32 %v1090, %v1162
        %v1164 = vpop.f32.mrb[0].mxu0
        %v1165 = vadd.f32 %v1092, %v1164
        %v1166 = vpop.f32.mrb[0].mxu0
        %v1167 = vadd.f32 %v1094, %v1166
        %v1168 = vpop.f32.mrb[0].mxu0
        %v1169 = vadd.f32 %v1096, %v1168
        %1170 = vmatprep.mubr.bf16.mxu0 %v461
        %1171 = vmatmul.mubr.bf16.gmra.mrb[0].mxu0 %v460
        %v1172 = vpop.f32.mrb[0].mxu0
        %v1173 = vadd.f32 %v1100, %v1172
        %v1174 = vpop.f32.mrb[0].mxu0
        %v1175 = vadd.f32 %v1102, %v1174
        %v1176 = vpop.f32.mrb[0].mxu0
        %v1177 = vadd.f32 %v1104, %v1176
        %v1178 = vpop.f32.mrb[0].mxu0
        %v1179 = vadd.f32 %v1106, %v1178
        %1180 = vmatprep.mubr.bf16.mxu0 %v467
        %1181 = vmatmul.mubr.bf16.gmra.mrb[0].mxu0 %v466
        %v1182 = vpop.f32.mrb[0].mxu0
        %v1183 = vadd.f32 %v1110, %v1182
        %v1184 = vpop.f32.mrb[0].mxu0
        %v1185 = vadd.f32 %v1112, %v1184
        %v1186 = vpop.f32.mrb[0].mxu0
        %v1187 = vadd.f32 %v1114, %v1186
        %v1188 = vpop.f32.mrb[0].mxu0
        %v1189 = vadd.f32 %v1116, %v1188
        %1190 = vdwg.mxu0
        %v1191 = vmul.f32 %v1153, %v1153
        %v1192 = vmul.f32 %v1155, %v1155
        %v1193 = vmul.f32 %v1157, %v1157
        %v1194 = vmul.f32 %v1159, %v1159
        %v1195 = vmul.f32 %v1163, %v1163
        %v1196 = vmul.f32 %v1165, %v1165
        %v1197 = vmul.f32 %v1167, %v1167
        %v1198 = vmul.f32 %v1169, %v1169
        %v1199 = vmul.f32 %v1173, %v1173
        %v1200 = vmul.f32 %v1175, %v1175
        %v1201 = vmul.f32 %v1177, %v1177
        %v1202 = vmul.f32 %v1179, %v1179
        %v1203 = vmul.f32 %v1183, %v1183
        %v1204 = vmul.f32 %v1185, %v1185
        %v1205 = vmul.f32 %v1187, %v1187
        %v1206 = vmul.f32 %v1189, %v1189
        %v1207 = vadd.f32 %v1191, %v1192
        %1208 = vadd.xlane.f32.xlu0 %v1207
        %v1209 = vpop.xlane.xlu0 %1208
        %v1210 = vadd.f32 %v1193, %v1194
        %1211 = vadd.xlane.f32.xlu0 %v1210
        %v1212 = vpop.xlane.xlu0 %1211
        %v1213 = vadd.f32 %v1195, %v1196
        %1214 = vadd.xlane.f32.xlu0 %v1213
        %v1215 = vpop.xlane.xlu0 %1214
        %v1216 = vadd.f32 %v1197, %v1198
        %1217 = vadd.xlane.f32.xlu0 %v1216
        %v1218 = vpop.xlane.xlu0 %1217
        %v1219 = vadd.f32 %v1199, %v1200
        %1220 = vadd.xlane.f32.xlu0 %v1219
        %v1221 = vpop.xlane.xlu0 %1220
        %v1222 = vadd.f32 %v1201, %v1202
        %1223 = vadd.xlane.f32.xlu0 %v1222
        %v1224 = vpop.xlane.xlu0 %1223
        %v1225 = vadd.f32 %v1203, %v1204
        %1226 = vadd.xlane.f32.xlu0 %v1225
        %v1227 = vpop.xlane.xlu0 %1226
        %v1228 = vadd.f32 %v1205, %v1206
        %1229 = vadd.xlane.f32.xlu0 %v1228
        %v1230 = vpop.xlane.xlu0 %1229
        %v1231 = vmax.f32 %v1209, 1e-24
        %v1232 = vmax.f32 %v1212, 1e-24
        %v1233 = vmax.f32 %v1215, 1e-24
        %v1234 = vmax.f32 %v1218, 1e-24
        %v1235 = vmax.f32 %v1221, 1e-24
        %v1236 = vmax.f32 %v1224, 1e-24
        %v1237 = vmax.f32 %v1227, 1e-24
        %v1238 = vmax.f32 %v1230, 1e-24
        %v1239 = vrsqrt.pop %v1231
        %v1240 = vrsqrt.pop %v1232
        %v1241 = vrsqrt.pop %v1233
        %v1242 = vrsqrt.pop %v1234
        %v1243 = vrsqrt.pop %v1235
        %v1244 = vrsqrt.pop %v1236
        %v1245 = vrsqrt.pop %v1237
        %v1246 = vrsqrt.pop %v1238
        %v1247 = vmul.f32 %v1153, %v1239
        %v1248 = vmul.f32 %v1155, %v1239
        %v1249 = vmul.f32 %v1157, %v1240
        %v1250 = vmul.f32 %v1159, %v1240
        %v1251 = vmul.f32 %v1163, %v1241
        %v1252 = vmul.f32 %v1165, %v1241
        %v1253 = vmul.f32 %v1167, %v1242
        %v1254 = vmul.f32 %v1169, %v1242
        %v1255 = vmul.f32 %v1173, %v1243
        %v1256 = vmul.f32 %v1175, %v1243
        %v1257 = vmul.f32 %v1177, %v1244
        %v1258 = vmul.f32 %v1179, %v1244
        %v1259 = vmul.f32 %v1183, %v1245
        %v1260 = vmul.f32 %v1185, %v1245
        %v1261 = vmul.f32 %v1187, %v1246
        %v1262 = vmul.f32 %v1189, %v1246
        %v1263 = vpack.c.bf16 %v1249, %v1247
        %v1264 = vpack.c.bf16 %v1250, %v1248
        %v1265 = vpack.c.bf16 %v1253, %v1251
        %v1266 = vpack.c.bf16 %v1254, %v1252
        %v1267 = vpack.c.bf16 %v1257, %v1255
        %v1268 = vpack.c.bf16 %v1258, %v1256
        %v1269 = vpack.c.bf16 %v1261, %v1259
        %v1270 = vpack.c.bf16 %v1262, %v1260
        %v1271 = vld [vmem:[#allocation7] sm:$0xff]
        %v1272 = vld [vmem:[#allocation7 + $0x8] sm:$0xff]
        %v1273 = vld [vmem:[#allocation7 + $0x10] sm:$0xff]
        %v1274 = vld [vmem:[#allocation7 + $0x18] sm:$0xff]
        %v1275 = vld [vmem:[#allocation7 + $0x20] sm:$0xff]
        %v1276 = vld [vmem:[#allocation7 + $0x28] sm:$0xff]
        %v1277 = vld [vmem:[#allocation7 + $0x30] sm:$0xff]
        %v1278 = vld [vmem:[#allocation7 + $0x38] sm:$0xff]
        %v1279 = vld [vmem:[#allocation7 + $0x40] sm:$0xff]
        %v1280 = vld [vmem:[#allocation7 + $0x48] sm:$0xff]
        %v1281 = vld [vmem:[#allocation7 + $0x50] sm:$0xff]
        %v1282 = vld [vmem:[#allocation7 + $0x58] sm:$0xff]
        %v1283 = vld [vmem:[#allocation7 + $0x60] sm:$0xff]
        %v1284 = vld [vmem:[#allocation7 + $0x68] sm:$0xff]
        %v1285 = vld [vmem:[#allocation7 + $0x70] sm:$0xff]
        %v1286 = vld [vmem:[#allocation7 + $0x78] sm:$0xff]
        %v1287 = vld [vmem:[#allocation7 + $0x80] sm:$0xff]
        %v1288 = vld [vmem:[#allocation7 + $0x88] sm:$0xff]
        %v1289 = vld [vmem:[#allocation7 + $0x90] sm:$0xff]
        %v1290 = vld [vmem:[#allocation7 + $0x98] sm:$0xff]
        %v1291 = vld [vmem:[#allocation7 + $0xa0] sm:$0xff]
        %v1292 = vld [vmem:[#allocation7 + $0xa8] sm:$0xff]
        %v1293 = vld [vmem:[#allocation7 + $0xb0] sm:$0xff]
        %v1294 = vld [vmem:[#allocation7 + $0xb8] sm:$0xff]
        %v1295 = vld [vmem:[#allocation7 + $0xc0] sm:$0xff]
        %v1296 = vld [vmem:[#allocation7 + $0xc8] sm:$0xff]
        %v1297 = vld [vmem:[#allocation7 + $0xd0] sm:$0xff]
        %v1298 = vld [vmem:[#allocation7 + $0xd8] sm:$0xff]
        %v1299 = vld [vmem:[#allocation7 + $0xe0] sm:$0xff]
        %v1300 = vld [vmem:[#allocation7 + $0xe8] sm:$0xff]
        %v1301 = vld [vmem:[#allocation7 + $0xf0] sm:$0xff]
        %v1302 = vld [vmem:[#allocation7 + $0xf8] sm:$0xff]
        %v1335 = vunpack.c.l.b16 %v1271
        %v1336 = vunpack.c.h.b16 %v1271
        %v1337 = vunpack.c.l.b16 %v1272
        %v1338 = vunpack.c.h.b16 %v1272
        %v1339 = vunpack.c.l.b16 %v1273
        %v1340 = vunpack.c.h.b16 %v1273
        %v1341 = vunpack.c.l.b16 %v1274
        %v1342 = vunpack.c.h.b16 %v1274
        %v1343 = vunpack.c.l.b16 %v1275
        %v1344 = vunpack.c.h.b16 %v1275
        %v1345 = vunpack.c.l.b16 %v1276
        %v1346 = vunpack.c.h.b16 %v1276
        %v1347 = vunpack.c.l.b16 %v1277
        %v1348 = vunpack.c.h.b16 %v1277
        %v1349 = vunpack.c.l.b16 %v1278
        %v1350 = vunpack.c.h.b16 %v1278
        %v1351 = vunpack.c.l.b16 %v1279
        %v1352 = vunpack.c.h.b16 %v1279
        %v1353 = vunpack.c.l.b16 %v1280
        %v1354 = vunpack.c.h.b16 %v1280
        %v1355 = vunpack.c.l.b16 %v1281
        %v1356 = vunpack.c.h.b16 %v1281
        %v1357 = vunpack.c.l.b16 %v1282
        %v1358 = vunpack.c.h.b16 %v1282
        %v1359 = vunpack.c.l.b16 %v1283
        %v1360 = vunpack.c.h.b16 %v1283
        %v1361 = vunpack.c.l.b16 %v1284
        %v1362 = vunpack.c.h.b16 %v1284
        %v1363 = vunpack.c.l.b16 %v1285
        %v1364 = vunpack.c.h.b16 %v1285
        %v1365 = vunpack.c.l.b16 %v1286
        %v1366 = vunpack.c.h.b16 %v1286
        %v1367 = vunpack.c.l.b16 %v1287
        %v1368 = vunpack.c.h.b16 %v1287
        %v1369 = vunpack.c.l.b16 %v1288
        %v1370 = vunpack.c.h.b16 %v1288
        %v1371 = vunpack.c.l.b16 %v1289
        %v1372 = vunpack.c.h.b16 %v1289
        %v1373 = vunpack.c.l.b16 %v1290
        %v1374 = vunpack.c.h.b16 %v1290
        %v1375 = vunpack.c.l.b16 %v1291
        %v1376 = vunpack.c.h.b16 %v1291
        %v1377 = vunpack.c.l.b16 %v1292
        %v1378 = vunpack.c.h.b16 %v1292
        %v1379 = vunpack.c.l.b16 %v1293
        %v1380 = vunpack.c.h.b16 %v1293
        %v1381 = vunpack.c.l.b16 %v1294
        %v1382 = vunpack.c.h.b16 %v1294
        %v1383 = vunpack.c.l.b16 %v1295
        %v1384 = vunpack.c.h.b16 %v1295
        %v1385 = vunpack.c.l.b16 %v1296
        %v1386 = vunpack.c.h.b16 %v1296
        %v1387 = vunpack.c.l.b16 %v1297
        %v1388 = vunpack.c.h.b16 %v1297
        %v1389 = vunpack.c.l.b16 %v1298
        %v1390 = vunpack.c.h.b16 %v1298
        %v1391 = vunpack.c.l.b16 %v1299
        %v1392 = vunpack.c.h.b16 %v1299
        %v1393 = vunpack.c.l.b16 %v1300
        %v1394 = vunpack.c.h.b16 %v1300
        %v1395 = vunpack.c.l.b16 %v1301
        %v1396 = vunpack.c.h.b16 %v1301
        %v1397 = vunpack.c.l.b16 %v1302
        %v1398 = vunpack.c.h.b16 %v1302
        %v1399 = vpack.c.b16 %v1337, %v1335
        %v1400 = vpack.c.b16 %v1338, %v1336
        %v1401 = vpack.c.b16 %v1341, %v1339
        %v1402 = vpack.c.b16 %v1342, %v1340
        %v1403 = vpack.c.b16 %v1345, %v1343
        %v1404 = vpack.c.b16 %v1346, %v1344
        %v1405 = vpack.c.b16 %v1349, %v1347
        %v1406 = vpack.c.b16 %v1350, %v1348
        %v1407 = vpack.c.b16 %v1353, %v1351
        %v1408 = vpack.c.b16 %v1354, %v1352
        %v1409 = vpack.c.b16 %v1357, %v1355
        %v1410 = vpack.c.b16 %v1358, %v1356
        %v1411 = vpack.c.b16 %v1361, %v1359
        %v1412 = vpack.c.b16 %v1362, %v1360
        %v1413 = vpack.c.b16 %v1365, %v1363
        %v1414 = vpack.c.b16 %v1366, %v1364
        %v1415 = vpack.c.b16 %v1369, %v1367
        %v1416 = vpack.c.b16 %v1370, %v1368
        %v1417 = vpack.c.b16 %v1373, %v1371
        %v1418 = vpack.c.b16 %v1374, %v1372
        %v1419 = vpack.c.b16 %v1377, %v1375
        %v1420 = vpack.c.b16 %v1378, %v1376
        %v1421 = vpack.c.b16 %v1381, %v1379
        %v1422 = vpack.c.b16 %v1382, %v1380
        %v1423 = vpack.c.b16 %v1385, %v1383
        %v1424 = vpack.c.b16 %v1386, %v1384
        %v1425 = vpack.c.b16 %v1389, %v1387
        %v1426 = vpack.c.b16 %v1390, %v1388
        %v1427 = vpack.c.b16 %v1393, %v1391
        %v1428 = vpack.c.b16 %v1394, %v1392
        %v1429 = vpack.c.b16 %v1397, %v1395
        %v1430 = vpack.c.b16 %v1398, %v1396
        %1463 = vmatprep.subr.bf16.mxu0 %v1400
        %1464 = vmatpush1.bf16.msra.mxu0 %v1399
        %1465 = vmatprep.subr.bf16.mxu0 %v1402
        %1466 = vmatpush1.bf16.msra.mxu0 %v1401
        %1467 = vmatprep.subr.bf16.mxu0 %v1404
        %1468 = vmatpush1.bf16.msra.mxu0 %v1403
        %1469 = vmatprep.subr.bf16.mxu0 %v1406
        %1470 = vmatpush1.bf16.msra.mxu0 %v1405
        %1471 = vmatprep.subr.bf16.mxu0 %v1408
        %1472 = vmatpush1.bf16.msra.mxu0 %v1407
        %1473 = vmatprep.subr.bf16.mxu0 %v1410
        %1474 = vmatpush1.bf16.msra.mxu0 %v1409
        %1475 = vmatprep.subr.bf16.mxu0 %v1412
        %1476 = vmatpush1.bf16.msra.mxu0 %v1411
        %1477 = vmatprep.subr.bf16.mxu0 %v1414
        %1478 = vmatpush1.bf16.msra.mxu0 %v1413
        %1479 = vmatprep.subr.bf16.mxu0 %v1416
        %1480 = vmatpush1.bf16.msra.mxu0 %v1415
        %1481 = vmatprep.subr.bf16.mxu0 %v1418
        %1482 = vmatpush1.bf16.msra.mxu0 %v1417
        %1483 = vmatprep.subr.bf16.mxu0 %v1420
        %1484 = vmatpush1.bf16.msra.mxu0 %v1419
        %1485 = vmatprep.subr.bf16.mxu0 %v1422
        %1486 = vmatpush1.bf16.msra.mxu0 %v1421
        %1487 = vmatprep.subr.bf16.mxu0 %v1424
        %1488 = vmatpush1.bf16.msra.mxu0 %v1423
        %1489 = vmatprep.subr.bf16.mxu0 %v1426
        %1490 = vmatpush1.bf16.msra.mxu0 %v1425
        %1491 = vmatprep.subr.bf16.mxu0 %v1428
        %1492 = vmatpush1.bf16.msra.mxu0 %v1427
        %1493 = vmatprep.subr.bf16.mxu0 %v1430
        %1494 = vmatpush1.bf16.msra.mxu0 %v1429
        %1495 = vmatprep.mubr.bf16.mxu0 %v1264
        %1496 = vmatmul.mubr.bf16.gmra.mrb[0].mxu0 %v1263
        %v1497 = vpop.f32.mrb[0].mxu0
        %v1498 = vadd.f32 0.0, %v1497
        %v1499 = vpop.f32.mrb[0].mxu0
        %v1500 = vadd.f32 0.0, %v1499
        %v1501 = vpop.f32.mrb[0].mxu0
        %v1502 = vadd.f32 0.0, %v1501
        %v1503 = vpop.f32.mrb[0].mxu0
        %v1504 = vadd.f32 0.0, %v1503
        %1505 = vmatprep.mubr.bf16.mxu0 %v1266
        %1506 = vmatmul.mubr.bf16.gmra.mrb[0].mxu0 %v1265
        %v1507 = vpop.f32.mrb[0].mxu0
        %v1508 = vadd.f32 0.0, %v1507
        %v1509 = vpop.f32.mrb[0].mxu0
        %v1510 = vadd.f32 0.0, %v1509
        %v1511 = vpop.f32.mrb[0].mxu0
        %v1512 = vadd.f32 0.0, %v1511
        %v1513 = vpop.f32.mrb[0].mxu0
        %v1514 = vadd.f32 0.0, %v1513
        %1515 = vmatprep.mubr.bf16.mxu0 %v1268
        %1516 = vmatmul.mubr.bf16.gmra.mrb[0].mxu0 %v1267
        %v1517 = vpop.f32.mrb[0].mxu0
        %v1518 = vadd.f32 0.0, %v1517
        %v1519 = vpop.f32.mrb[0].mxu0
        %v1520 = vadd.f32 0.0, %v1519
        %v1521 = vpop.f32.mrb[0].mxu0
        %v1522 = vadd.f32 0.0, %v1521
        %v1523 = vpop.f32.mrb[0].mxu0
        %v1524 = vadd.f32 0.0, %v1523
        %1525 = vmatprep.mubr.bf16.mxu0 %v1270
        %1526 = vmatmul.mubr.bf16.gmra.mrb[0].mxu0 %v1269
        %v1527 = vpop.f32.mrb[0].mxu0
        %v1528 = vadd.f32 0.0, %v1527
        %v1529 = vpop.f32.mrb[0].mxu0
        %v1530 = vadd.f32 0.0, %v1529
        %v1531 = vpop.f32.mrb[0].mxu0
        %v1532 = vadd.f32 0.0, %v1531
        %v1533 = vpop.f32.mrb[0].mxu0
        %v1534 = vadd.f32 0.0, %v1533
        %1535 = vdwg.mxu0
        %1536 = vst [vmem:[%s242] sm:$0xff] %v1498
        %1537 = vst [vmem:[%s242 + $0x8] sm:$0xff] %v1500
        %1538 = vst [vmem:[%s242 + $0x10] sm:$0xff] %v1502
        %1539 = vst [vmem:[%s242 + $0x18] sm:$0xff] %v1504
        %1540 = vst [vmem:[%s242 + $0x20] sm:$0xff] %v1508
        %1541 = vst [vmem:[%s242 + $0x28] sm:$0xff] %v1510
        %1542 = vst [vmem:[%s242 + $0x30] sm:$0xff] %v1512
        %1543 = vst [vmem:[%s242 + $0x38] sm:$0xff] %v1514
        %1544 = vst [vmem:[%s242 + $0x40] sm:$0xff] %v1518
        %1545 = vst [vmem:[%s242 + $0x48] sm:$0xff] %v1520
        %1546 = vst [vmem:[%s242 + $0x50] sm:$0xff] %v1522
        %1547 = vst [vmem:[%s242 + $0x58] sm:$0xff] %v1524
        %1548 = vst [vmem:[%s242 + $0x60] sm:$0xff] %v1528
        %1549 = vst [vmem:[%s242 + $0x68] sm:$0xff] %v1530
        %1550 = vst [vmem:[%s242 + $0x70] sm:$0xff] %v1532
        %1551 = vst [vmem:[%s242 + $0x78] sm:$0xff] %v1534
        %v1552 = vadd.f32 %v1498, %v1502
        %v1553 = vadd.f32 %v1552, %v1508
        %v1554 = vadd.f32 %v1553, %v1512
        %v1555 = vadd.f32 %v1554, %v1518
        %v1556 = vadd.f32 %v1555, %v1522
        %v1557 = vadd.f32 %v1556, %v1528
        %v1558 = vadd.f32 %v1557, %v1532
        %v1559 = vrot.slane %v1558, 4
        %v1560 = vadd.f32 %v1558, %v1559
        %v1561 = vrot.slane %v1560, 2
        %v1562 = vadd.f32 %v1560, %v1561
        %v1563 = vrot.slane %v1562, 1
        %v1564 = vadd.f32 %v1562, %v1563
        %v1565 = vadd.f32 %v1500, %v1504
        %v1566 = vadd.f32 %v1565, %v1510
        %v1567 = vadd.f32 %v1566, %v1514
        %v1568 = vadd.f32 %v1567, %v1520
        %v1569 = vadd.f32 %v1568, %v1524
        %v1570 = vadd.f32 %v1569, %v1530
        %v1571 = vadd.f32 %v1570, %v1534
        %v1572 = vrot.slane %v1571, 4
        %v1573 = vadd.f32 %v1571, %v1572
        %v1574 = vrot.slane %v1573, 2
        %v1575 = vadd.f32 %v1573, %v1574
        %v1576 = vrot.slane %v1575, 1
        %v1577 = vadd.f32 %v1575, %v1576
        %v1578 = vmul.f32 %v1498, %v1498
        %v1579 = vmul.f32 %v1500, %v1500
        %v1580 = vmul.f32 %v1502, %v1502
        %v1581 = vmul.f32 %v1504, %v1504
        %v1582 = vmul.f32 %v1508, %v1508
        %v1583 = vmul.f32 %v1510, %v1510
        %v1584 = vmul.f32 %v1512, %v1512
        %v1585 = vmul.f32 %v1514, %v1514
        %v1586 = vmul.f32 %v1518, %v1518
        %v1587 = vmul.f32 %v1520, %v1520
        %v1588 = vmul.f32 %v1522, %v1522
        %v1589 = vmul.f32 %v1524, %v1524
        %v1590 = vmul.f32 %v1528, %v1528
        %v1591 = vmul.f32 %v1530, %v1530
        %v1592 = vmul.f32 %v1532, %v1532
        %v1593 = vmul.f32 %v1534, %v1534
        %v1594 = vadd.f32 %v1578, %v1580
        %v1595 = vadd.f32 %v1594, %v1582
        %v1596 = vadd.f32 %v1595, %v1584
        %v1597 = vadd.f32 %v1596, %v1586
        %v1598 = vadd.f32 %v1597, %v1588
        %v1599 = vadd.f32 %v1598, %v1590
        %v1600 = vadd.f32 %v1599, %v1592
        %v1601 = vrot.slane %v1600, 4
        %v1602 = vadd.f32 %v1600, %v1601
        %v1603 = vrot.slane %v1602, 2
        %v1604 = vadd.f32 %v1602, %v1603
        %v1605 = vrot.slane %v1604, 1
        %v1606 = vadd.f32 %v1604, %v1605
        %v1607 = vadd.f32 %v1579, %v1581
        %v1608 = vadd.f32 %v1607, %v1583
        %v1609 = vadd.f32 %v1608, %v1585
        %v1610 = vadd.f32 %v1609, %v1587
        %v1611 = vadd.f32 %v1610, %v1589
        %v1612 = vadd.f32 %v1611, %v1591
        %v1613 = vadd.f32 %v1612, %v1593
        %v1614 = vrot.slane %v1613, 4
        %v1615 = vadd.f32 %v1613, %v1614
        %v1616 = vrot.slane %v1615, 2
        %v1617 = vadd.f32 %v1615, %v1616
        %v1618 = vrot.slane %v1617, 1
        %v1619 = vadd.f32 %v1617, %v1618
        %v1620 = vld [vmem:[#allocation9] sm:$0xf]
        %vm1621 = vcmask 1040384
        %v1622 = vsel %vm1621, %v1564, %v1606
        %v1623 = vsel %vm1621, %v1577, %v1619
        %v1626 = vcombine.low %v1622, %v1623
        %v1628 = vunpack.c.l.s4 1983009808
        %v1629 = vunpack.c.0.s8 %v1628
        %v1630 = vlaneseq
        %v1631 = vshrl.u32 %v1630, 7
        %v1632 = vsub.s32 %v1629, %v1631
        %v1633 = vrot.slane %v1626, %v1632
        %v1635 = vadd.f32 %v1620, %v1633
        %1636 = vst [vmem:[#allocation9] sm:$0xf] %v1635
        %s1637 = sand.u32 %s100, 1
        %s1638 = scalar_lea.sflag [#allocation4], %s1637
        %s1639 = sand.u32 %s100, 1
        %s1640 = smul.addr %s1639, 128
        %s1641 = scalar_lea.vmem [#allocation8], %s1640
        // Predicated region
        $region49: #{tpu_custom_call.1} parent=31 // pred_check
          %p1642 = pneg %p110
        $region50: #{tpu_custom_call.1} parent=31 // pred_check_branch
          %1644 = sbr.rel (%p1642) target = $region52
        $region51: #{tpu_custom_call.1} parent=31 // pred_region
          %s1645 = smul.u32 8, %s24
          %s1647 = ssub.s32 2048, 2048
          %1648 = vsyncadd %s1638, %s1647
          %s1649 = smul.addr %s1645, 2
          %s1650 = smul.addr %s1649, 128
          %s1651 = scalar_lea.hbm %s3, %s1650
          %s1652 = sshll.u32 %s1641, 4
          %s1653 = int_to_ptr.vmem [resolvable:$true] %s1652
          %1658 = dma.vmem_to_hbm [thread:$0]  %s1653, 2048, %s1651, %s1638, 256, 256, 16
        $region52: #{tpu_custom_call.1} parent=31 // pred_fallthru
          _
        // Predicated region
        $region53: #{tpu_custom_call.1} parent=31 // pred_check
          %p1659 = pneg %p131
        $region54: #{tpu_custom_call.1} parent=31 // pred_check_branch
          %1661 = sbr.rel (%p1659) target = $region56
        $region55: #{tpu_custom_call.1} parent=31 // pred_region
          %s1663 = ssub.s32 64, 64
          %1664 = vsyncadd [#allocation10], %s1663
          %s1666 = sshll.u32 [#allocation9], 4
          %s1667 = int_to_ptr.vmem [resolvable:$true] %s1666
          %1669 = dma.vmem_to_hbm [thread:$0]  %s1667, 64, %s4, [#allocation10]
        $region56: #{tpu_custom_call.1} parent=31 // pred_fallthru
          _
        // Predicated region
        $region57: #{tpu_custom_call.1} parent=31 // pred_check
          %p1670 = pneg %p131
        $region58: #{tpu_custom_call.1} parent=31 // pred_check_branch
          %1672 = sbr.rel (%p1670) target = $region60
        $region59: #{tpu_custom_call.1} parent=31 // pred_region
          %1673 = dma.done [#allocation10], 64
        $region60: #{tpu_custom_call.1} parent=31 // pred_fallthru
          _
      $region32: #{tpu_custom_call.1} parent=5 // pred_fallthru
        _
      %p1674 = scmp.le.s32.totalorder 2, %s19
      // Predicated region
      $region61: #{tpu_custom_call.1} parent=5 // pred_check
        %p1675 = pneg %p1674
      $region62: #{tpu_custom_call.1} parent=5 // pred_check_branch
        %1677 = sbr.rel (%p1675) target = $region64
      $region63: #{tpu_custom_call.1} parent=5 // pred_region
        %s1678 = ssub.s32 %s19, 2
        // Predicated region
        $region65: #{tpu_custom_call.1} parent=63 // pred_check
          %p1679 = pneg %p116
        $region66: #{tpu_custom_call.1} parent=63 // pred_check_branch
          %1681 = sbr.rel (%p1679) target = $region68
        $region67: #{tpu_custom_call.1} parent=63 // pred_region
          %s1682 = sand.u32 %s101, 1
          %s1683 = scalar_lea.sflag [#allocation4], %s1682
          %s1684 = sand.u32 %s101, 1
          %s1685 = smul.addr %s1684, 128
          %s1686 = scalar_lea.vmem [#allocation8], %s1685
          %1687 = dma.done %s1683, 2048
        $region68: #{tpu_custom_call.1} parent=63 // pred_fallthru
          _
      $region64: #{tpu_custom_call.1} parent=5 // pred_fallthru
        _
    $region6: #{tpu_custom_call.1} parent=1 // loop_footer
      %s23 = sadd.s32 1, %s19
    $region7: #{tpu_custom_call.1} parent=1 // loop_footer_branch
      %18 = sbr.rel target = $region3
    $region8: #{tpu_custom_call.1} parent=1 // loop_exit
      _
    %1688 = vsyncpa [#allocation3], 1
    %s1689 = scalar_lea.sflag [#allocation3], 1
    %1690 = vsyncpa %s1689, 1
    %1691 = vsyncpa [#allocation6], 1
    %1692 = vsyncpa [#allocation4], 1
    %s1693 = scalar_lea.sflag [#allocation4], 1
    %1694 = vsyncpa %s1693, 1
    %1695 = vsyncpa [#allocation10], 1

</llo_original>
